<compile_context>
chip_gen: v7x
topology: tpu7x:2x2x1
jax: 0.10.0
libtpu: 0.0.40
codegen_flags: <defaults>
</compile_context>

<pallas_src>
import jax
import jax.numpy as jnp
from jax import lax
from jax.experimental import pallas as pl
from jax.experimental.pallas import tpu as pltpu

HIDDEN_SIZE = 72
NUM_LAYERS = 1  # the module uses a single-layer GRU

LANE = 128
SUBLANE = 8


def _round_up(x, m):
    return (x + m - 1) // m * m


def gru_fc_kernel(x_ref, wih_ref, whh_ref, bfold_ref, bhn_ref, wfc_ref,
                  bfc_ref, out_ref, gi_ref):
    """GRU recurrence + final Linear, all lane/sublane padded.

    x_ref    : (T*Bp, D)    bf16 time-major input, batch padded to Bp sublanes
    wih_ref  : (D, 3*Hp)    bf16, gate blocks lane-aligned at 0 / Hp / 2*Hp
    whh_ref  : (Hp, 3*Hp)   bf16
    bfold_ref: (1, 3*Hp)    f32, b_ih (all gates) + b_hh (r, z only), padded
    bhn_ref  : (1, Hp)      f32, b_hh for n gate (must stay inside r*(...))
    wfc_ref  : (Hp, Op)     bf16
    bfc_ref  : (1, Op)      f32
    out_ref  : (Bp, Op)     f32
    gi_ref   : (T*Bp, 3*Hp) f32 VMEM scratch: hoisted input projection
    """
    Bp = out_ref.shape[0]
    Hp = whh_ref.shape[0]
    T = x_ref.shape[0] // Bp

    # Hoisted input projection: one big bf16 MXU matmul (f32 accumulate) off
    # the serial critical path, with loop-invariant biases folded in.
    gi_ref[...] = (
        jnp.dot(x_ref[...], wih_ref[...], preferred_element_type=jnp.float32)
        + bfold_ref[...])

    bhn = jnp.broadcast_to(bhn_ref[...], (Bp, Hp))  # 1 vreg, hoisted broadcast

    def step(t, h):
        row = pl.multiple_of(t * Bp, SUBLANE)
        gi = gi_ref[pl.ds(row, Bp), :]                               # (Bp,3Hp)
        # Stream W_hh from VMEM each step (no 24/48-vreg live value held
        # across the unrolled body); cast h to bf16 only at the MXU boundary.
        # TODO(synk): keep W_hh resident in MXU weight regs via
        # pltpu.matmul_push_rhs/matmul_acc_lhs/matmul_pop once the multi-tile
        # RHS staging semantics are pinned down; jnp.dot restages the RHS
        # every step of this latency-bound chain.
        gh = jnp.dot(h.astype(jnp.bfloat16), whh_ref[...],
                     preferred_element_type=jnp.float32)             # (Bp,3Hp)
        # PyTorch GRU gate order r, z, n; gate blocks are 128-lane aligned so
        # the fused r/z sigmoid and its split are relayout-free.
        rz = jax.nn.sigmoid(gi[:, 0:2 * Hp] + gh[:, 0:2 * Hp])
        r = rz[:, 0:Hp]
        z = rz[:, Hp:2 * Hp]
        n = jnp.tanh(gi[:, 2 * Hp:3 * Hp] + r * (gh[:, 2 * Hp:3 * Hp] + bhn))
        return (1.0 - z) * n + z * h

    h = lax.fori_loop(0, T, step, jnp.zeros((Bp, Hp), jnp.float32),
                      unroll=True)

    out_ref[...] = (
        jnp.dot(h.astype(jnp.bfloat16), wfc_ref[...],
                preferred_element_type=jnp.float32)
        + bfc_ref[...])


@jax.jit
def rnn_forward(x, params):
    """x: (B, T, input_size) float32, batch_first like the PyTorch module."""
    B, T, D = x.shape
    H = params["w_hh_t"].shape[0]
    O = params["w_fc_t"].shape[1]

    Hp = _round_up(H, LANE)
    Op = _round_up(O, LANE)
    Bp = _round_up(B, SUBLANE)
    f32 = jnp.float32
    bf16 = jnp.bfloat16

    # --- lane-align + zero-pad weights (gate blocks at 0 / Hp / 2*Hp) ---
    def pad_gate_cols(w):  # (in, 3H) -> (in, 3*Hp)
        i = w.shape[0]
        w3 = w.reshape(i, 3, H)
        w3 = jnp.pad(w3, ((0, 0), (0, 0), (0, Hp - H)))
        return w3.reshape(i, 3 * Hp)

    # Matmul operands in bf16 (MXU-native on v5e/v6e/v7x); accumulation and
    # all elementwise gate math stay f32.
    wih_p = pad_gate_cols(params["w_ih_t"].astype(f32)).astype(bf16)   # (D,3Hp)
    whh_p = pad_gate_cols(params["w_hh_t"].astype(f32))                # (H,3Hp)
    whh_p = jnp.pad(whh_p, ((0, Hp - H), (0, 0))).astype(bf16)         # (Hp,3Hp)

    b_ih3 = params["b_ih"].reshape(3, H).astype(f32)
    b_hh3 = params["b_hh"].reshape(3, H).astype(f32)
    # Fold b_ih (all gates) + b_hh (r, z) into the hoisted projection bias.
    fold = b_ih3 + b_hh3 * jnp.array([[1.0], [1.0], [0.0]], f32)
    bfold = jnp.pad(fold, ((0, 0), (0, Hp - H))).reshape(1, 3 * Hp)
    bhn = jnp.pad(b_hh3[2], (0, Hp - H)).reshape(1, Hp)

    wfc_p = jnp.pad(params["w_fc_t"].astype(f32),
                    ((0, Hp - H), (0, Op - O))).astype(bf16)           # (Hp,Op)
    bfc_p = jnp.pad(params["b_fc"].astype(f32), (0, Op - O)).reshape(1, Op)

    # --- time-major, sublane-padded batch, flattened (T*Bp, D) bf16 input ---
    x_tbd = jnp.transpose(x.astype(f32), (1, 0, 2))                    # (T,B,D)
    x_tbd = jnp.pad(x_tbd, ((0, 0), (0, Bp - B), (0, 0)))              # (T,Bp,D)
    x_flat = x_tbd.reshape(T * Bp, D).astype(bf16)

    flops = (2 * T * Bp * D * 3 * Hp          # hoisted input projection
             + 2 * T * Bp * Hp * 3 * Hp       # recurrent matmuls
             + 2 * Bp * Hp * Op)              # final Linear
    transcendentals = T * Bp * 3 * Hp
    bytes_accessed = (
        2 * (x_flat.size + wih_p.size + whh_p.size + wfc_p.size)   # bf16 ins
        + 4 * (bfold.size + bhn.size + bfc_p.size + Bp * Op)       # f32 io
        + 2 * T * Bp * 3 * Hp * 4)                                 # gi scratch

    vmem = pl.BlockSpec(memory_space=pltpu.MemorySpace.VMEM)
    out = pl.pallas_call(
        gru_fc_kernel,
        out_shape=jax.ShapeDtypeStruct((Bp, Op), f32),
        in_specs=[vmem] * 7,
        out_specs=vmem,
        scratch_shapes=[pltpu.VMEM((T * Bp, 3 * Hp), f32)],
        compiler_params=pltpu.CompilerParams(
            vmem_limit_bytes=16 * 1024 * 1024),
        cost_estimate=pl.CostEstimate(
            flops=flops,
            transcendentals=transcendentals,
            bytes_accessed=bytes_accessed),
    )(x_flat, wih_p, whh_p, bfold, bhn, wfc_p, bfc_p)

    # TODO(synk): for large T, make time an "arbitrary" grid axis with h in a
    # persistent VMEM scratch and size the per-chunk gi/x blocks for v7x's
    # 64 MiB VMEM (re-derive vmem_limit separately from v5e/v6e); if padded
    # batch exceeds ~16, add a leading "parallel" batch grid axis so v7x's
    # second TensorCore is used.  Unnecessary at these shapes.
    return out[:B, :O]


def init_params(key, input_size, hidden_size, output_size):
    """Deterministic init mimicking PyTorch's U(-1/sqrt(H), 1/sqrt(H))."""
    ks = jax.random.split(key, 6)
    s = 1.0 / jnp.sqrt(jnp.float32(hidden_size))

    def u(k, shape):
        return jax.random.uniform(k, shape, jnp.float32, -s, s)

    # Stored pre-transposed: (in_dim, out_dim); biases flat.
    return {
        "w_ih_t": u(ks[0], (input_size, 3 * hidden_size)),
        "w_hh_t": u(ks[1], (hidden_size, 3 * hidden_size)),
        "b_ih": u(ks[2], (3 * hidden_size,)),
        "b_hh": u(ks[3], (3 * hidden_size,)),
        "w_fc_t": u(ks[4], (hidden_size, output_size)),
        "b_fc": u(ks[5], (output_size,)),
    }


def reference_forward(x, params, matmul_dtype=jnp.float32):
    """Pure-JAX reference of the PyTorch forward.

    matmul_dtype=bf16 reproduces the kernel's matmul-boundary casts (f32
    accumulation, f32 elementwise) for a tight numerical comparison.
    """
    B, T, D = x.shape
    H = params["w_hh_t"].shape[0]
    md = matmul_dtype
    w_ih = params["w_ih_t"].astype(md)
    w_hh = params["w_hh_t"].astype(md)
    w_fc = params["w_fc_t"].astype(md)
    h = jnp.zeros((B, H), jnp.float32)
    for t in range(T):
        x_t = x[:, t, :].astype(md)
        gi = jnp.dot(x_t, w_ih,
                     preferred_element_type=jnp.float32) + params["b_ih"]
        gh = jnp.dot(h.astype(md), w_hh,
                     preferred_element_type=jnp.float32) + params["b_hh"]
        r = jax.nn.sigmoid(gi[:, :H] + gh[:, :H])
        z = jax.nn.sigmoid(gi[:, H:2 * H] + gh[:, H:2 * H])
        n = jnp.tanh(gi[:, 2 * H:] + r * gh[:, 2 * H:])
        h = (1.0 - z) * n + z * h
    return (jnp.dot(h.astype(md), w_fc, preferred_element_type=jnp.float32)
            + params["b_fc"])


if __name__ == "__main__":
    key = jax.random.PRNGKey(0)
    k_x, k_p = jax.random.split(key)

    batch, seq, input_size, output_size = 2, 8, 16, 10
    x = jax.random.normal(k_x, (batch, seq, input_size), jnp.float32)
    params = init_params(k_p, input_size, HIDDEN_SIZE, output_size)

    out = jax.block_until_ready(rnn_forward(x, params))
    assert out.shape == (batch, output_size)

    # Tight check vs. a reference using the same bf16-operand / f32-accumulate
    # matmul arithmetic as the kernel.
    ref_matched = reference_forward(x, params, matmul_dtype=jnp.bfloat16)
    assert jnp.allclose(out, ref_matched, atol=1e-3, rtol=1e-3), \
        "mismatch vs bf16-matmul reference"

    # Looser check vs. the pure-f32 reference (difference is only bf16
    # rounding of matmul inputs, accumulation stays f32).
    ref_f32 = reference_forward(x, params, matmul_dtype=jnp.float32)
    assert jnp.allclose(out, ref_f32, atol=5e-2, rtol=5e-2), \
        "mismatch vs f32 reference"

    print("KERNEL_OK")
</pallas_src>

<mosaic_0001>
module attributes {stable_mosaic.version = 11 : i64} {
  func.func @gru_fc_kernel(%arg0: memref<64x16xbf16, #tpu.memory_space<vmem>>, %arg1: memref<16x384xbf16, #tpu.memory_space<vmem>>, %arg2: memref<128x384xbf16, #tpu.memory_space<vmem>>, %arg3: memref<1x384xf32, #tpu.memory_space<vmem>>, %arg4: memref<1x128xf32, #tpu.memory_space<vmem>>, %arg5: memref<128x128xbf16, #tpu.memory_space<vmem>>, %arg6: memref<1x128xf32, #tpu.memory_space<vmem>>, %arg7: memref<8x128xf32, #tpu.memory_space<vmem>>, %arg8: memref<64x384xf32, #tpu.memory_space<vmem>>) attributes {dimension_semantics = [], scalar_prefetch = 0 : i64, scratch_operands = 1 : i64, tpu.core_type = #tpu.core_type<tc>} {
    %c0 = arith.constant 0 : index
    %c0_0 = arith.constant 0 : index
    %0 = vector.load %arg0[%c0, %c0_0] : memref<64x16xbf16, #tpu.memory_space<vmem>>, vector<64x16xbf16>
    %c0_1 = arith.constant 0 : index
    %c0_2 = arith.constant 0 : index
    %1 = vector.load %arg1[%c0_1, %c0_2] : memref<16x384xbf16, #tpu.memory_space<vmem>>, vector<16x384xbf16>
    %cst = arith.constant dense<0.000000e+00> : vector<64x384xf32>
    %2 = tpu.matmul %0, %1, %cst {dimension_numbers = #tpu.dot_dimension_numbers<[1], [0], [0], [1], [0, 0, 1, 1], [], []>} : vector<64x16xbf16>, vector<16x384xbf16>, vector<64x384xf32> -> vector<64x384xf32>
    %c0_3 = arith.constant 0 : index
    %c0_4 = arith.constant 0 : index
    %3 = vector.load %arg3[%c0_3, %c0_4] : memref<1x384xf32, #tpu.memory_space<vmem>>, vector<1x384xf32>
    %4 = vector.broadcast %3 : vector<1x384xf32> to vector<64x384xf32>
    %5 = arith.addf %2, %4 : vector<64x384xf32>
    %c0_5 = arith.constant 0 : index
    %c0_6 = arith.constant 0 : index
    %6 = vector.load %arg8[%c0_5, %c0_6] : memref<64x384xf32, #tpu.memory_space<vmem>>, vector<64x384xf32>
    tpu.vector_store %arg8[%c0_5, %c0_6], %5 {strides = array<i32>} : memref<64x384xf32, #tpu.memory_space<vmem>>, vector<64x384xf32>,
    %c0_7 = arith.constant 0 : index
    %c0_8 = arith.constant 0 : index
    %7 = vector.load %arg4[%c0_7, %c0_8] : memref<1x128xf32, #tpu.memory_space<vmem>>, vector<1x128xf32>
    %8 = vector.shape_cast %7 : vector<1x128xf32> to vector<1x128xf32>
    %9 = vector.broadcast %8 : vector<1x128xf32> to vector<8x128xf32>
    %cst_9 = arith.constant 0.000000e+00 : f32
    %10 = vector.broadcast %cst_9 : f32 to vector<8x128xf32>
    %c0_i32 = arith.constant 0 : i32
    %c8_i32 = arith.constant 8 : i32
    %11 = arith.muli %c0_i32, %c8_i32 : i32
    %12 = tpu.assume_multiple %11, 8 : i32
    %13 = arith.index_cast %12 : i32 to index
    %c0_10 = arith.constant 0 : index
    %14 = vector.load %arg8[%13, %c0_10] : memref<64x384xf32, #tpu.memory_space<vmem>>, vector<8x384xf32>
    %15 = arith.truncf %10 : vector<8x128xf32> to vector<8x128xbf16>
    %c0_11 = arith.constant 0 : index
    %c0_12 = arith.constant 0 : index
    %16 = vector.load %arg2[%c0_11, %c0_12] : memref<128x384xbf16, #tpu.memory_space<vmem>>, vector<128x384xbf16>
    %cst_13 = arith.constant dense<0.000000e+00> : vector<8x384xf32>
    %17 = tpu.matmul %15, %16, %cst_13 {dimension_numbers = #tpu.dot_dimension_numbers<[1], [0], [0], [1], [0, 0, 1, 1], [], []>} : vector<8x128xbf16>, vector<128x384xbf16>, vector<8x384xf32> -> vector<8x384xf32>
    %18 = vector.extract_strided_slice %14 {offsets = [0, 0], sizes = [8, 256], strides = [1, 1]} : vector<8x384xf32> to vector<8x256xf32>
    %19 = vector.extract_strided_slice %17 {offsets = [0, 0], sizes = [8, 256], strides = [1, 1]} : vector<8x384xf32> to vector<8x256xf32>
    %20 = arith.addf %18, %19 : vector<8x256xf32>
    %21 = arith.negf %20 : vector<8x256xf32>
    %22 = math.exp %21 : vector<8x256xf32>
    %cst_14 = arith.constant 1.000000e+00 : f32
    %23 = vector.broadcast %cst_14 : f32 to vector<8x256xf32>
    %24 = arith.addf %23, %22 : vector<8x256xf32>
    %25 = arith.divf %23, %24 : vector<8x256xf32>
    %26 = vector.extract_strided_slice %25 {offsets = [0, 0], sizes = [8, 128], strides = [1, 1]} : vector<8x256xf32> to vector<8x128xf32>
    %27 = vector.extract_strided_slice %25 {offsets = [0, 128], sizes = [8, 128], strides = [1, 1]} : vector<8x256xf32> to vector<8x128xf32>
    %28 = vector.extract_strided_slice %14 {offsets = [0, 256], sizes = [8, 128], strides = [1, 1]} : vector<8x384xf32> to vector<8x128xf32>
    %29 = vector.extract_strided_slice %17 {offsets = [0, 256], sizes = [8, 128], strides = [1, 1]} : vector<8x384xf32> to vector<8x128xf32>
    %30 = arith.addf %29, %9 : vector<8x128xf32>
    %31 = arith.mulf %26, %30 : vector<8x128xf32>
    %32 = arith.addf %28, %31 : vector<8x128xf32>
    %33 = math.tanh %32 : vector<8x128xf32>
    %cst_15 = arith.constant 1.000000e+00 : f32
    %34 = vector.broadcast %cst_15 : f32 to vector<8x128xf32>
    %35 = arith.subf %34, %27 : vector<8x128xf32>
    %36 = arith.mulf %35, %33 : vector<8x128xf32>
    %37 = arith.mulf %27, %10 : vector<8x128xf32>
    %38 = arith.addf %36, %37 : vector<8x128xf32>
    %c1_i32 = arith.constant 1 : i32
    %c8_i32_16 = arith.constant 8 : i32
    %39 = arith.muli %c1_i32, %c8_i32_16 : i32
    %40 = tpu.assume_multiple %39, 8 : i32
    %41 = arith.index_cast %40 : i32 to index
    %c0_17 = arith.constant 0 : index
    %42 = vector.load %arg8[%41, %c0_17] : memref<64x384xf32, #tpu.memory_space<vmem>>, vector<8x384xf32>
    %43 = arith.truncf %38 : vector<8x128xf32> to vector<8x128xbf16>
    %c0_18 = arith.constant 0 : index
    %c0_19 = arith.constant 0 : index
    %44 = vector.load %arg2[%c0_18, %c0_19] : memref<128x384xbf16, #tpu.memory_space<vmem>>, vector<128x384xbf16>
    %cst_20 = arith.constant dense<0.000000e+00> : vector<8x384xf32>
    %45 = tpu.matmul %43, %44, %cst_20 {dimension_numbers = #tpu.dot_dimension_numbers<[1], [0], [0], [1], [0, 0, 1, 1], [], []>} : vector<8x128xbf16>, vector<128x384xbf16>, vector<8x384xf32> -> vector<8x384xf32>
    %46 = vector.extract_strided_slice %42 {offsets = [0, 0], sizes = [8, 256], strides = [1, 1]} : vector<8x384xf32> to vector<8x256xf32>
    %47 = vector.extract_strided_slice %45 {offsets = [0, 0], sizes = [8, 256], strides = [1, 1]} : vector<8x384xf32> to vector<8x256xf32>
    %48 = arith.addf %46, %47 : vector<8x256xf32>
    %49 = arith.negf %48 : vector<8x256xf32>
    %50 = math.exp %49 : vector<8x256xf32>
    %cst_21 = arith.constant 1.000000e+00 : f32
    %51 = vector.broadcast %cst_21 : f32 to vector<8x256xf32>
    %52 = arith.addf %51, %50 : vector<8x256xf32>
    %53 = arith.divf %51, %52 : vector<8x256xf32>
    %54 = vector.extract_strided_slice %53 {offsets = [0, 0], sizes = [8, 128], strides = [1, 1]} : vector<8x256xf32> to vector<8x128xf32>
    %55 = vector.extract_strided_slice %53 {offsets = [0, 128], sizes = [8, 128], strides = [1, 1]} : vector<8x256xf32> to vector<8x128xf32>
    %56 = vector.extract_strided_slice %42 {offsets = [0, 256], sizes = [8, 128], strides = [1, 1]} : vector<8x384xf32> to vector<8x128xf32>
    %57 = vector.extract_strided_slice %45 {offsets = [0, 256], sizes = [8, 128], strides = [1, 1]} : vector<8x384xf32> to vector<8x128xf32>
    %58 = arith.addf %57, %9 : vector<8x128xf32>
    %59 = arith.mulf %54, %58 : vector<8x128xf32>
    %60 = arith.addf %56, %59 : vector<8x128xf32>
    %61 = math.tanh %60 : vector<8x128xf32>
    %cst_22 = arith.constant 1.000000e+00 : f32
    %62 = vector.broadcast %cst_22 : f32 to vector<8x128xf32>
    %63 = arith.subf %62, %55 : vector<8x128xf32>
    %64 = arith.mulf %63, %61 : vector<8x128xf32>
    %65 = arith.mulf %55, %38 : vector<8x128xf32>
    %66 = arith.addf %64, %65 : vector<8x128xf32>
    %c2_i32 = arith.constant 2 : i32
    %c8_i32_23 = arith.constant 8 : i32
    %67 = arith.muli %c2_i32, %c8_i32_23 : i32
    %68 = tpu.assume_multiple %67, 8 : i32
    %69 = arith.index_cast %68 : i32 to index
    %c0_24 = arith.constant 0 : index
    %70 = vector.load %arg8[%69, %c0_24] : memref<64x384xf32, #tpu.memory_space<vmem>>, vector<8x384xf32>
    %71 = arith.truncf %66 : vector<8x128xf32> to vector<8x128xbf16>
    %c0_25 = arith.constant 0 : index
    %c0_26 = arith.constant 0 : index
    %72 = vector.load %arg2[%c0_25, %c0_26] : memref<128x384xbf16, #tpu.memory_space<vmem>>, vector<128x384xbf16>
    %cst_27 = arith.constant dense<0.000000e+00> : vector<8x384xf32>
    %73 = tpu.matmul %71, %72, %cst_27 {dimension_numbers = #tpu.dot_dimension_numbers<[1], [0], [0], [1], [0, 0, 1, 1], [], []>} : vector<8x128xbf16>, vector<128x384xbf16>, vector<8x384xf32> -> vector<8x384xf32>
    %74 = vector.extract_strided_slice %70 {offsets = [0, 0], sizes = [8, 256], strides = [1, 1]} : vector<8x384xf32> to vector<8x256xf32>
    %75 = vector.extract_strided_slice %73 {offsets = [0, 0], sizes = [8, 256], strides = [1, 1]} : vector<8x384xf32> to vector<8x256xf32>
    %76 = arith.addf %74, %75 : vector<8x256xf32>
    %77 = arith.negf %76 : vector<8x256xf32>
    %78 = math.exp %77 : vector<8x256xf32>
    %cst_28 = arith.constant 1.000000e+00 : f32
    %79 = vector.broadcast %cst_28 : f32 to vector<8x256xf32>
    %80 = arith.addf %79, %78 : vector<8x256xf32>
    %81 = arith.divf %79, %80 : vector<8x256xf32>
    %82 = vector.extract_strided_slice %81 {offsets = [0, 0], sizes = [8, 128], strides = [1, 1]} : vector<8x256xf32> to vector<8x128xf32>
    %83 = vector.extract_strided_slice %81 {offsets = [0, 128], sizes = [8, 128], strides = [1, 1]} : vector<8x256xf32> to vector<8x128xf32>
    %84 = vector.extract_strided_slice %70 {offsets = [0, 256], sizes = [8, 128], strides = [1, 1]} : vector<8x384xf32> to vector<8x128xf32>
    %85 = vector.extract_strided_slice %73 {offsets = [0, 256], sizes = [8, 128], strides = [1, 1]} : vector<8x384xf32> to vector<8x128xf32>
    %86 = arith.addf %85, %9 : vector<8x128xf32>
    %87 = arith.mulf %82, %86 : vector<8x128xf32>
    %88 = arith.addf %84, %87 : vector<8x128xf32>
    %89 = math.tanh %88 : vector<8x128xf32>
    %cst_29 = arith.constant 1.000000e+00 : f32
    %90 = vector.broadcast %cst_29 : f32 to vector<8x128xf32>
    %91 = arith.subf %90, %83 : vector<8x128xf32>
    %92 = arith.mulf %91, %89 : vector<8x128xf32>
    %93 = arith.mulf %83, %66 : vector<8x128xf32>
    %94 = arith.addf %92, %93 : vector<8x128xf32>
    %c3_i32 = arith.constant 3 : i32
    %c8_i32_30 = arith.constant 8 : i32
    %95 = arith.muli %c3_i32, %c8_i32_30 : i32
    %96 = tpu.assume_multiple %95, 8 : i32
    %97 = arith.index_cast %96 : i32 to index
    %c0_31 = arith.constant 0 : index
    %98 = vector.load %arg8[%97, %c0_31] : memref<64x384xf32, #tpu.memory_space<vmem>>, vector<8x384xf32>
    %99 = arith.truncf %94 : vector<8x128xf32> to vector<8x128xbf16>
    %c0_32 = arith.constant 0 : index
    %c0_33 = arith.constant 0 : index
    %100 = vector.load %arg2[%c0_32, %c0_33] : memref<128x384xbf16, #tpu.memory_space<vmem>>, vector<128x384xbf16>
    %cst_34 = arith.constant dense<0.000000e+00> : vector<8x384xf32>
    %101 = tpu.matmul %99, %100, %cst_34 {dimension_numbers = #tpu.dot_dimension_numbers<[1], [0], [0], [1], [0, 0, 1, 1], [], []>} : vector<8x128xbf16>, vector<128x384xbf16>, vector<8x384xf32> -> vector<8x384xf32>
    %102 = vector.extract_strided_slice %98 {offsets = [0, 0], sizes = [8, 256], strides = [1, 1]} : vector<8x384xf32> to vector<8x256xf32>
    %103 = vector.extract_strided_slice %101 {offsets = [0, 0], sizes = [8, 256], strides = [1, 1]} : vector<8x384xf32> to vector<8x256xf32>
    %104 = arith.addf %102, %103 : vector<8x256xf32>
    %105 = arith.negf %104 : vector<8x256xf32>
    %106 = math.exp %105 : vector<8x256xf32>
    %cst_35 = arith.constant 1.000000e+00 : f32
    %107 = vector.broadcast %cst_35 : f32 to vector<8x256xf32>
    %108 = arith.addf %107, %106 : vector<8x256xf32>
    %109 = arith.divf %107, %108 : vector<8x256xf32>
    %110 = vector.extract_strided_slice %109 {offsets = [0, 0], sizes = [8, 128], strides = [1, 1]} : vector<8x256xf32> to vector<8x128xf32>
    %111 = vector.extract_strided_slice %109 {offsets = [0, 128], sizes = [8, 128], strides = [1, 1]} : vector<8x256xf32> to vector<8x128xf32>
    %112 = vector.extract_strided_slice %98 {offsets = [0, 256], sizes = [8, 128], strides = [1, 1]} : vector<8x384xf32> to vector<8x128xf32>
    %113 = vector.extract_strided_slice %101 {offsets = [0, 256], sizes = [8, 128], strides = [1, 1]} : vector<8x384xf32> to vector<8x128xf32>
    %114 = arith.addf %113, %9 : vector<8x128xf32>
    %115 = arith.mulf %110, %114 : vector<8x128xf32>
    %116 = arith.addf %112, %115 : vector<8x128xf32>
    %117 = math.tanh %116 : vector<8x128xf32>
    %cst_36 = arith.constant 1.000000e+00 : f32
    %118 = vector.broadcast %cst_36 : f32 to vector<8x128xf32>
    %119 = arith.subf %118, %111 : vector<8x128xf32>
    %120 = arith.mulf %119, %117 : vector<8x128xf32>
    %121 = arith.mulf %111, %94 : vector<8x128xf32>
    %122 = arith.addf %120, %121 : vector<8x128xf32>
    %c4_i32 = arith.constant 4 : i32
    %c8_i32_37 = arith.constant 8 : i32
    %123 = arith.muli %c4_i32, %c8_i32_37 : i32
    %124 = tpu.assume_multiple %123, 8 : i32
    %125 = arith.index_cast %124 : i32 to index
    %c0_38 = arith.constant 0 : index
    %126 = vector.load %arg8[%125, %c0_38] : memref<64x384xf32, #tpu.memory_space<vmem>>, vector<8x384xf32>
    %127 = arith.truncf %122 : vector<8x128xf32> to vector<8x128xbf16>
    %c0_39 = arith.constant 0 : index
    %c0_40 = arith.constant 0 : index
    %128 = vector.load %arg2[%c0_39, %c0_40] : memref<128x384xbf16, #tpu.memory_space<vmem>>, vector<128x384xbf16>
    %cst_41 = arith.constant dense<0.000000e+00> : vector<8x384xf32>
    %129 = tpu.matmul %127, %128, %cst_41 {dimension_numbers = #tpu.dot_dimension_numbers<[1], [0], [0], [1], [0, 0, 1, 1], [], []>} : vector<8x128xbf16>, vector<128x384xbf16>, vector<8x384xf32> -> vector<8x384xf32>
    %130 = vector.extract_strided_slice %126 {offsets = [0, 0], sizes = [8, 256], strides = [1, 1]} : vector<8x384xf32> to vector<8x256xf32>
    %131 = vector.extract_strided_slice %129 {offsets = [0, 0], sizes = [8, 256], strides = [1, 1]} : vector<8x384xf32> to vector<8x256xf32>
    %132 = arith.addf %130, %131 : vector<8x256xf32>
    %133 = arith.negf %132 : vector<8x256xf32>
    %134 = math.exp %133 : vector<8x256xf32>
    %cst_42 = arith.constant 1.000000e+00 : f32
    %135 = vector.broadcast %cst_42 : f32 to vector<8x256xf32>
    %136 = arith.addf %135, %134 : vector<8x256xf32>
    %137 = arith.divf %135, %136 : vector<8x256xf32>
    %138 = vector.extract_strided_slice %137 {offsets = [0, 0], sizes = [8, 128], strides = [1, 1]} : vector<8x256xf32> to vector<8x128xf32>
    %139 = vector.extract_strided_slice %137 {offsets = [0, 128], sizes = [8, 128], strides = [1, 1]} : vector<8x256xf32> to vector<8x128xf32>
    %140 = vector.extract_strided_slice %126 {offsets = [0, 256], sizes = [8, 128], strides = [1, 1]} : vector<8x384xf32> to vector<8x128xf32>
    %141 = vector.extract_strided_slice %129 {offsets = [0, 256], sizes = [8, 128], strides = [1, 1]} : vector<8x384xf32> to vector<8x128xf32>
    %142 = arith.addf %141, %9 : vector<8x128xf32>
    %143 = arith.mulf %138, %142 : vector<8x128xf32>
    %144 = arith.addf %140, %143 : vector<8x128xf32>
    %145 = math.tanh %144 : vector<8x128xf32>
    %cst_43 = arith.constant 1.000000e+00 : f32
    %146 = vector.broadcast %cst_43 : f32 to vector<8x128xf32>
    %147 = arith.subf %146, %139 : vector<8x128xf32>
    %148 = arith.mulf %147, %145 : vector<8x128xf32>
    %149 = arith.mulf %139, %122 : vector<8x128xf32>
    %150 = arith.addf %148, %149 : vector<8x128xf32>
    %c5_i32 = arith.constant 5 : i32
    %c8_i32_44 = arith.constant 8 : i32
    %151 = arith.muli %c5_i32, %c8_i32_44 : i32
    %152 = tpu.assume_multiple %151, 8 : i32
    %153 = arith.index_cast %152 : i32 to index
    %c0_45 = arith.constant 0 : index
    %154 = vector.load %arg8[%153, %c0_45] : memref<64x384xf32, #tpu.memory_space<vmem>>, vector<8x384xf32>
    %155 = arith.truncf %150 : vector<8x128xf32> to vector<8x128xbf16>
    %c0_46 = arith.constant 0 : index
    %c0_47 = arith.constant 0 : index
    %156 = vector.load %arg2[%c0_46, %c0_47] : memref<128x384xbf16, #tpu.memory_space<vmem>>, vector<128x384xbf16>
    %cst_48 = arith.constant dense<0.000000e+00> : vector<8x384xf32>
    %157 = tpu.matmul %155, %156, %cst_48 {dimension_numbers = #tpu.dot_dimension_numbers<[1], [0], [0], [1], [0, 0, 1, 1], [], []>} : vector<8x128xbf16>, vector<128x384xbf16>, vector<8x384xf32> -> vector<8x384xf32>
    %158 = vector.extract_strided_slice %154 {offsets = [0, 0], sizes = [8, 256], strides = [1, 1]} : vector<8x384xf32> to vector<8x256xf32>
    %159 = vector.extract_strided_slice %157 {offsets = [0, 0], sizes = [8, 256], strides = [1, 1]} : vector<8x384xf32> to vector<8x256xf32>
    %160 = arith.addf %158, %159 : vector<8x256xf32>
    %161 = arith.negf %160 : vector<8x256xf32>
    %162 = math.exp %161 : vector<8x256xf32>
    %cst_49 = arith.constant 1.000000e+00 : f32
    %163 = vector.broadcast %cst_49 : f32 to vector<8x256xf32>
    %164 = arith.addf %163, %162 : vector<8x256xf32>
    %165 = arith.divf %163, %164 : vector<8x256xf32>
    %166 = vector.extract_strided_slice %165 {offsets = [0, 0], sizes = [8, 128], strides = [1, 1]} : vector<8x256xf32> to vector<8x128xf32>
    %167 = vector.extract_strided_slice %165 {offsets = [0, 128], sizes = [8, 128], strides = [1, 1]} : vector<8x256xf32> to vector<8x128xf32>
    %168 = vector.extract_strided_slice %154 {offsets = [0, 256], sizes = [8, 128], strides = [1, 1]} : vector<8x384xf32> to vector<8x128xf32>
    %169 = vector.extract_strided_slice %157 {offsets = [0, 256], sizes = [8, 128], strides = [1, 1]} : vector<8x384xf32> to vector<8x128xf32>
    %170 = arith.addf %169, %9 : vector<8x128xf32>
    %171 = arith.mulf %166, %170 : vector<8x128xf32>
    %172 = arith.addf %168, %171 : vector<8x128xf32>
    %173 = math.tanh %172 : vector<8x128xf32>
    %cst_50 = arith.constant 1.000000e+00 : f32
    %174 = vector.broadcast %cst_50 : f32 to vector<8x128xf32>
    %175 = arith.subf %174, %167 : vector<8x128xf32>
    %176 = arith.mulf %175, %173 : vector<8x128xf32>
    %177 = arith.mulf %167, %150 : vector<8x128xf32>
    %178 = arith.addf %176, %177 : vector<8x128xf32>
    %c6_i32 = arith.constant 6 : i32
    %c8_i32_51 = arith.constant 8 : i32
    %179 = arith.muli %c6_i32, %c8_i32_51 : i32
    %180 = tpu.assume_multiple %179, 8 : i32
    %181 = arith.index_cast %180 : i32 to index
    %c0_52 = arith.constant 0 : index
    %182 = vector.load %arg8[%181, %c0_52] : memref<64x384xf32, #tpu.memory_space<vmem>>, vector<8x384xf32>
    %183 = arith.truncf %178 : vector<8x128xf32> to vector<8x128xbf16>
    %c0_53 = arith.constant 0 : index
    %c0_54 = arith.constant 0 : index
    %184 = vector.load %arg2[%c0_53, %c0_54] : memref<128x384xbf16, #tpu.memory_space<vmem>>, vector<128x384xbf16>
    %cst_55 = arith.constant dense<0.000000e+00> : vector<8x384xf32>
    %185 = tpu.matmul %183, %184, %cst_55 {dimension_numbers = #tpu.dot_dimension_numbers<[1], [0], [0], [1], [0, 0, 1, 1], [], []>} : vector<8x128xbf16>, vector<128x384xbf16>, vector<8x384xf32> -> vector<8x384xf32>
    %186 = vector.extract_strided_slice %182 {offsets = [0, 0], sizes = [8, 256], strides = [1, 1]} : vector<8x384xf32> to vector<8x256xf32>
    %187 = vector.extract_strided_slice %185 {offsets = [0, 0], sizes = [8, 256], strides = [1, 1]} : vector<8x384xf32> to vector<8x256xf32>
    %188 = arith.addf %186, %187 : vector<8x256xf32>
    %189 = arith.negf %188 : vector<8x256xf32>
    %190 = math.exp %189 : vector<8x256xf32>
    %cst_56 = arith.constant 1.000000e+00 : f32
    %191 = vector.broadcast %cst_56 : f32 to vector<8x256xf32>
    %192 = arith.addf %191, %190 : vector<8x256xf32>
    %193 = arith.divf %191, %192 : vector<8x256xf32>
    %194 = vector.extract_strided_slice %193 {offsets = [0, 0], sizes = [8, 128], strides = [1, 1]} : vector<8x256xf32> to vector<8x128xf32>
    %195 = vector.extract_strided_slice %193 {offsets = [0, 128], sizes = [8, 128], strides = [1, 1]} : vector<8x256xf32> to vector<8x128xf32>
    %196 = vector.extract_strided_slice %182 {offsets = [0, 256], sizes = [8, 128], strides = [1, 1]} : vector<8x384xf32> to vector<8x128xf32>
    %197 = vector.extract_strided_slice %185 {offsets = [0, 256], sizes = [8, 128], strides = [1, 1]} : vector<8x384xf32> to vector<8x128xf32>
    %198 = arith.addf %197, %9 : vector<8x128xf32>
    %199 = arith.mulf %194, %198 : vector<8x128xf32>
    %200 = arith.addf %196, %199 : vector<8x128xf32>
    %201 = math.tanh %200 : vector<8x128xf32>
    %cst_57 = arith.constant 1.000000e+00 : f32
    %202 = vector.broadcast %cst_57 : f32 to vector<8x128xf32>
    %203 = arith.subf %202, %195 : vector<8x128xf32>
    %204 = arith.mulf %203, %201 : vector<8x128xf32>
    %205 = arith.mulf %195, %178 : vector<8x128xf32>
    %206 = arith.addf %204, %205 : vector<8x128xf32>
    %c7_i32 = arith.constant 7 : i32
    %c8_i32_58 = arith.constant 8 : i32
    %207 = arith.muli %c7_i32, %c8_i32_58 : i32
    %208 = tpu.assume_multiple %207, 8 : i32
    %209 = arith.index_cast %208 : i32 to index
    %c0_59 = arith.constant 0 : index
    %210 = vector.load %arg8[%209, %c0_59] : memref<64x384xf32, #tpu.memory_space<vmem>>, vector<8x384xf32>
    %211 = arith.truncf %206 : vector<8x128xf32> to vector<8x128xbf16>
    %c0_60 = arith.constant 0 : index
    %c0_61 = arith.constant 0 : index
    %212 = vector.load %arg2[%c0_60, %c0_61] : memref<128x384xbf16, #tpu.memory_space<vmem>>, vector<128x384xbf16>
    %cst_62 = arith.constant dense<0.000000e+00> : vector<8x384xf32>
    %213 = tpu.matmul %211, %212, %cst_62 {dimension_numbers = #tpu.dot_dimension_numbers<[1], [0], [0], [1], [0, 0, 1, 1], [], []>} : vector<8x128xbf16>, vector<128x384xbf16>, vector<8x384xf32> -> vector<8x384xf32>
    %214 = vector.extract_strided_slice %210 {offsets = [0, 0], sizes = [8, 256], strides = [1, 1]} : vector<8x384xf32> to vector<8x256xf32>
    %215 = vector.extract_strided_slice %213 {offsets = [0, 0], sizes = [8, 256], strides = [1, 1]} : vector<8x384xf32> to vector<8x256xf32>
    %216 = arith.addf %214, %215 : vector<8x256xf32>
    %217 = arith.negf %216 : vector<8x256xf32>
    %218 = math.exp %217 : vector<8x256xf32>
    %cst_63 = arith.constant 1.000000e+00 : f32
    %219 = vector.broadcast %cst_63 : f32 to vector<8x256xf32>
    %220 = arith.addf %219, %218 : vector<8x256xf32>
    %221 = arith.divf %219, %220 : vector<8x256xf32>
    %222 = vector.extract_strided_slice %221 {offsets = [0, 0], sizes = [8, 128], strides = [1, 1]} : vector<8x256xf32> to vector<8x128xf32>
    %223 = vector.extract_strided_slice %221 {offsets = [0, 128], sizes = [8, 128], strides = [1, 1]} : vector<8x256xf32> to vector<8x128xf32>
    %224 = vector.extract_strided_slice %210 {offsets = [0, 256], sizes = [8, 128], strides = [1, 1]} : vector<8x384xf32> to vector<8x128xf32>
    %225 = vector.extract_strided_slice %213 {offsets = [0, 256], sizes = [8, 128], strides = [1, 1]} : vector<8x384xf32> to vector<8x128xf32>
    %226 = arith.addf %225, %9 : vector<8x128xf32>
    %227 = arith.mulf %222, %226 : vector<8x128xf32>
    %228 = arith.addf %224, %227 : vector<8x128xf32>
    %229 = math.tanh %228 : vector<8x128xf32>
    %cst_64 = arith.constant 1.000000e+00 : f32
    %230 = vector.broadcast %cst_64 : f32 to vector<8x128xf32>
    %231 = arith.subf %230, %223 : vector<8x128xf32>
    %232 = arith.mulf %231, %229 : vector<8x128xf32>
    %233 = arith.mulf %223, %206 : vector<8x128xf32>
    %234 = arith.addf %232, %233 : vector<8x128xf32>
    %c8_i32_65 = arith.constant 8 : i32
    %235 = arith.truncf %234 : vector<8x128xf32> to vector<8x128xbf16>
    %c0_66 = arith.constant 0 : index
    %c0_67 = arith.constant 0 : index
    %236 = vector.load %arg5[%c0_66, %c0_67] : memref<128x128xbf16, #tpu.memory_space<vmem>>, vector<128x128xbf16>
    %cst_68 = arith.constant dense<0.000000e+00> : vector<8x128xf32>
    %237 = tpu.matmul %235, %236, %cst_68 {dimension_numbers = #tpu.dot_dimension_numbers<[1], [0], [0], [1], [0, 0, 1, 1], [], []>} : vector<8x128xbf16>, vector<128x128xbf16>, vector<8x128xf32> -> vector<8x128xf32>
    %c0_69 = arith.constant 0 : index
    %c0_70 = arith.constant 0 : index
    %238 = vector.load %arg6[%c0_69, %c0_70] : memref<1x128xf32, #tpu.memory_space<vmem>>, vector<1x128xf32>
    %239 = vector.broadcast %238 : vector<1x128xf32> to vector<8x128xf32>
    %240 = arith.addf %237, %239 : vector<8x128xf32>
    %c0_71 = arith.constant 0 : index
    %c0_72 = arith.constant 0 : index
    %241 = vector.load %arg7[%c0_71, %c0_72] : memref<8x128xf32, #tpu.memory_space<vmem>>, vector<8x128xf32>
    tpu.vector_store %arg7[%c0_71, %c0_72], %240 {strides = array<i32>} : memref<8x128xf32, #tpu.memory_space<vmem>>, vector<8x128xf32>,
    return
  }
}

</mosaic_0001>

<llo_original>
// kernel: rnn_forward.1
$region0: #{rnn_forward.1}
  #allocation0 [shape = 'u32[]', space=smem, size = 0x4, offset = 0x4, fixed_abs, tag = 'smem constant byte address 0x4 - core index']
  #allocation1 [shape = 'u32[144,128]{1,0:T(1,128)}', space=vmem, size = 0x12000, scoped, tag = 'internal scratch']
  #allocation2 [shape = 'f32[64,384]{1,0:T(8,128)}', space=vmem, size = 0x18000, scoped, tag = 'scratch operand']
  %s0 = inlined_call_operand.vmem [shape: bf16[64,16], index: 0, kind: input, shape index: {}]
  %s1 = inlined_call_operand.vmem [shape: bf16[16,384], index: 1, kind: input, shape index: {}]
  %s2 = inlined_call_operand.vmem [shape: bf16[128,384], index: 2, kind: input, shape index: {}]
  %s3 = inlined_call_operand.vmem [shape: f32[1,384], index: 3, kind: input, shape index: {}]
  %s4 = inlined_call_operand.vmem [shape: f32[1,128], index: 4, kind: input, shape index: {}]
  %s5 = inlined_call_operand.vmem [shape: bf16[128,128], index: 5, kind: input, shape index: {}]
  %s6 = inlined_call_operand.vmem [shape: f32[1,128], index: 6, kind: input, shape index: {}]
  %s7 = inlined_call_operand.vmem [shape: f32[8,128], index: 7, kind: output, shape index: {}]
  %s8 = sld [smem:[#allocation0]]
  $region38: #{rnn_forward.1} parent=0
    _
  %s10 = ssub.s32 1, %s8
  %s11 = scalar_select 0, %s10, %s8
  // Predicated region
  $region2: #{rnn_forward.1} parent=0 // pred_check
    _
  $region3: #{rnn_forward.1} parent=0 // pred_check_branch
    %13 = sbr.rel (0) target = $region5
  $region4: #{rnn_forward.1} parent=0 // pred_region
    _
  $region5: #{rnn_forward.1} parent=0 // pred_fallthru
    _
  // Predicated region
  $region6: #{rnn_forward.1} parent=0 // pred_check
    _
  $region7: #{rnn_forward.1} parent=0 // pred_check_branch
    %15 = sbr.rel (0) target = $region9
  $region8: #{rnn_forward.1} parent=0 // pred_region
    _
  $region9: #{rnn_forward.1} parent=0 // pred_fallthru
    _
  // Predicated region
  $region10: #{rnn_forward.1} parent=0 // pred_check
    _
  $region11: #{rnn_forward.1} parent=0 // pred_check_branch
    %17 = sbr.rel (0) target = $region13
  $region12: #{rnn_forward.1} parent=0 // pred_region
    _
  $region13: #{rnn_forward.1} parent=0 // pred_fallthru
    _
  // Predicated region
  $region14: #{rnn_forward.1} parent=0 // pred_check
    _
  $region15: #{rnn_forward.1} parent=0 // pred_check_branch
    %19 = sbr.rel (0) target = $region17
  $region16: #{rnn_forward.1} parent=0 // pred_region
    _
  $region17: #{rnn_forward.1} parent=0 // pred_fallthru
    _
  // Predicated region
  $region18: #{rnn_forward.1} parent=0 // pred_check
    _
  $region19: #{rnn_forward.1} parent=0 // pred_check_branch
    %21 = sbr.rel (0) target = $region21
  $region20: #{rnn_forward.1} parent=0 // pred_region
    _
  $region21: #{rnn_forward.1} parent=0 // pred_fallthru
    _
  // Predicated region
  $region22: #{rnn_forward.1} parent=0 // pred_check
    _
  $region23: #{rnn_forward.1} parent=0 // pred_check_branch
    %23 = sbr.rel (0) target = $region25
  $region24: #{rnn_forward.1} parent=0 // pred_region
    _
  $region25: #{rnn_forward.1} parent=0 // pred_fallthru
    _
  // Predicated region
  $region26: #{rnn_forward.1} parent=0 // pred_check
    _
  $region27: #{rnn_forward.1} parent=0 // pred_check_branch
    %25 = sbr.rel (0) target = $region29
  $region28: #{rnn_forward.1} parent=0 // pred_region
    _
  $region29: #{rnn_forward.1} parent=0 // pred_fallthru
    _
  %v27 = vld [vmem:[%s0] sm:$0xf]
  %v28 = vld [vmem:[%s0 + $0x4] sm:$0xf]
  %v29 = vld [vmem:[%s0 + $0x8] sm:$0xf]
  %v30 = vld [vmem:[%s0 + $0xc] sm:$0xf]
  %v31 = vld [vmem:[%s0 + $0x10] sm:$0xf]
  %v32 = vld [vmem:[%s0 + $0x14] sm:$0xf]
  %v33 = vld [vmem:[%s0 + $0x18] sm:$0xf]
  %v34 = vld [vmem:[%s0 + $0x1c] sm:$0xf]
  %v35 = vld [vmem:[%s1] sm:$0xff]
  %v36 = vld [vmem:[%s1 + $0x8] sm:$0xf]
  %v37 = vld [vmem:[%s1 + $0xc] sm:$0xff]
  %v38 = vld [vmem:[%s1 + $0x14] sm:$0xf]
  %v39 = vld [vmem:[%s3] sm:$0x7]
  %v41 = vlaneseq
  %v42 = vshrl.u32 %v41, 7
  %v43 = vsub.s32 0, %v42
  %v44 = vrot.slane %v39, %v43
  %v45 = vlaneseq
  %v46 = vshrl.u32 %v45, 7
  %v47 = vsub.s32 1, %v46
  %v48 = vrot.slane %v39, %v47
  %v49 = vlaneseq
  %v50 = vshrl.u32 %v49, 7
  %v51 = vsub.s32 2, %v50
  %v52 = vrot.slane %v39, %v51
  %v64 = vunpack.c.l.b16 %v27
  %v65 = vunpack.c.l.b16 %v28
  %v66 = vunpack.c.l.b16 %v29
  %v67 = vunpack.c.l.b16 %v30
  %v68 = vunpack.c.l.b16 %v31
  %v69 = vunpack.c.l.b16 %v32
  %v70 = vunpack.c.l.b16 %v33
  %v71 = vunpack.c.l.b16 %v34
  %v72 = vpack.c.b16 %v65, %v64
  %v73 = vpack.c.b16 %v67, %v66
  %v74 = vpack.c.b16 %v69, %v68
  %v75 = vpack.c.b16 %v71, %v70
  %v80 = vunpack.c.l.b16 %v35
  %v81 = vunpack.c.h.b16 %v35
  %v82 = vunpack.c.l.b16 %v36
  %v83 = vunpack.c.l.b16 %v37
  %v84 = vunpack.c.h.b16 %v37
  %v85 = vunpack.c.l.b16 %v38
  %v86 = vpack.c.b16 %v83, %v80
  %v87 = vpack.c.b16 %v84, %v81
  %v88 = vpack.c.b16 %v85, %v82
  %vm92 = vcmask 130048
  %v94 = vsel %vm92, %v72, 0
  %v97 = vsel %vm92, %v73, 0
  %v100 = vsel %vm92, %v74, 0
  %v103 = vsel %vm92, %v75, 0
  %105 = vmatprep.subr.bf16.mxu0 %v87
  %106 = vmatpush1.bf16.msra.mxu0 %v86
  %107 = vmatprep.subr.bf16.mxu0 0
  %108 = vmatpush1.bf16.msra.mxu0 0
  %109 = vmatprep.subr.bf16.mxu0 0
  %110 = vmatpush1.bf16.msra.mxu0 0
  %111 = vmatprep.subr.bf16.mxu0 0
  %112 = vmatpush1.bf16.msra.mxu0 0
  %113 = vmatprep.subr.bf16.mxu0 0
  %114 = vmatpush1.bf16.msra.mxu0 0
  %115 = vmatprep.subr.bf16.mxu0 0
  %116 = vmatpush1.bf16.msra.mxu0 0
  %117 = vmatprep.subr.bf16.mxu0 0
  %118 = vmatpush1.bf16.msra.mxu0 0
  %119 = vmatprep.subr.bf16.mxu0 0
  %120 = vmatpush1.bf16.msra.mxu0 0
  %121 = vmatprep.subr.bf16.mxu0 0
  %122 = vmatpush1.bf16.msra.mxu0 0
  %123 = vmatprep.subr.bf16.mxu0 0
  %124 = vmatpush1.bf16.msra.mxu0 0
  %125 = vmatprep.subr.bf16.mxu0 0
  %126 = vmatpush1.bf16.msra.mxu0 0
  %127 = vmatprep.subr.bf16.mxu0 0
  %128 = vmatpush1.bf16.msra.mxu0 0
  %129 = vmatprep.subr.bf16.mxu0 0
  %130 = vmatpush1.bf16.msra.mxu0 0
  %131 = vmatprep.subr.bf16.mxu0 0
  %132 = vmatpush1.bf16.msra.mxu0 0
  %133 = vmatprep.subr.bf16.mxu0 0
  %134 = vmatpush1.bf16.msra.mxu0 0
  %135 = vmatprep.subr.bf16.mxu0 0
  %136 = vmatpush1.bf16.msra.mxu0 0
  %137 = vmatprep.mubr.bf16.mxu0 0
  %138 = vmatmul.mubr.bf16.gmra.mrb[0].mxu0 %v94
  %v139 = vpop.f32.mrb[0].mxu0
  %v140 = vadd.f32 %v44, %v139
  %v141 = vpop.f32.mrb[0].mxu0
  %v142 = vadd.f32 %v48, %v141
  %v143 = vpop.f32.mrb[0].mxu0
  %v144 = vadd.f32 %v44, %v143
  %v145 = vpop.f32.mrb[0].mxu0
  %v146 = vadd.f32 %v48, %v145
  %147 = vmatprep.mubr.bf16.mxu0 0
  %148 = vmatmul.mubr.bf16.gmra.mrb[0].mxu0 %v97
  %v149 = vpop.f32.mrb[0].mxu0
  %v150 = vadd.f32 %v44, %v149
  %v151 = vpop.f32.mrb[0].mxu0
  %v152 = vadd.f32 %v48, %v151
  %v153 = vpop.f32.mrb[0].mxu0
  %v154 = vadd.f32 %v44, %v153
  %v155 = vpop.f32.mrb[0].mxu0
  %v156 = vadd.f32 %v48, %v155
  %157 = vmatprep.mubr.bf16.mxu0 0
  %158 = vmatmul.mubr.bf16.gmra.mrb[0].mxu0 %v100
  %v159 = vpop.f32.mrb[0].mxu0
  %v160 = vadd.f32 %v44, %v159
  %v161 = vpop.f32.mrb[0].mxu0
  %v162 = vadd.f32 %v48, %v161
  %v163 = vpop.f32.mrb[0].mxu0
  %v164 = vadd.f32 %v44, %v163
  %v165 = vpop.f32.mrb[0].mxu0
  %v166 = vadd.f32 %v48, %v165
  %167 = vmatprep.mubr.bf16.mxu0 0
  %168 = vmatmul.mubr.bf16.gmra.mrb[0].mxu0 %v103
  %v169 = vpop.f32.mrb[0].mxu0
  %v170 = vadd.f32 %v44, %v169
  %v171 = vpop.f32.mrb[0].mxu0
  %v172 = vadd.f32 %v48, %v171
  %v173 = vpop.f32.mrb[0].mxu0
  %v174 = vadd.f32 %v44, %v173
  %v175 = vpop.f32.mrb[0].mxu0
  %v176 = vadd.f32 %v48, %v175
  %177 = vdwg.mxu0
  %178 = vmatprep.subr.bf16.mxu0 0
  %179 = vmatpush1.bf16.msra.mxu0 %v88
  %180 = vmatprep.subr.bf16.mxu0 0
  %181 = vmatpush1.bf16.msra.mxu0 0
  %182 = vmatprep.subr.bf16.mxu0 0
  %183 = vmatpush1.bf16.msra.mxu0 0
  %184 = vmatprep.subr.bf16.mxu0 0
  %185 = vmatpush1.bf16.msra.mxu0 0
  %186 = vmatprep.subr.bf16.mxu0 0
  %187 = vmatpush1.bf16.msra.mxu0 0
  %188 = vmatprep.subr.bf16.mxu0 0
  %189 = vmatpush1.bf16.msra.mxu0 0
  %190 = vmatprep.subr.bf16.mxu0 0
  %191 = vmatpush1.bf16.msra.mxu0 0
  %192 = vmatprep.subr.bf16.mxu0 0
  %193 = vmatpush1.bf16.msra.mxu0 0
  %194 = vmatprep.subr.bf16.mxu0 0
  %195 = vmatpush1.bf16.msra.mxu0 0
  %196 = vmatprep.subr.bf16.mxu0 0
  %197 = vmatpush1.bf16.msra.mxu0 0
  %198 = vmatprep.subr.bf16.mxu0 0
  %199 = vmatpush1.bf16.msra.mxu0 0
  %200 = vmatprep.subr.bf16.mxu0 0
  %201 = vmatpush1.bf16.msra.mxu0 0
  %202 = vmatprep.subr.bf16.mxu0 0
  %203 = vmatpush1.bf16.msra.mxu0 0
  %204 = vmatprep.subr.bf16.mxu0 0
  %205 = vmatpush1.bf16.msra.mxu0 0
  %206 = vmatprep.subr.bf16.mxu0 0
  %207 = vmatpush1.bf16.msra.mxu0 0
  %208 = vmatprep.subr.bf16.mxu0 0
  %209 = vmatpush1.bf16.msra.mxu0 0
  %210 = vmatprep.mubr.bf16.mxu0 0
  %211 = vmatmul.mubr.bf16.gmra.mrb[0].mxu0 %v94
  %v212 = vpop.f32.mrb[0].mxu0
  %v213 = vadd.f32 %v52, %v212
  %v214 = vpop.f32.mrb[0].mxu0
  %v215 = vpop.f32.mrb[0].mxu0
  %v216 = vadd.f32 %v52, %v215
  %v217 = vpop.f32.mrb[0].mxu0
  %218 = vmatprep.mubr.bf16.mxu0 0
  %219 = vmatmul.mubr.bf16.gmra.mrb[0].mxu0 %v97
  %v220 = vpop.f32.mrb[0].mxu0
  %v221 = vadd.f32 %v52, %v220
  %v222 = vpop.f32.mrb[0].mxu0
  %v223 = vpop.f32.mrb[0].mxu0
  %v224 = vadd.f32 %v52, %v223
  %v225 = vpop.f32.mrb[0].mxu0
  %226 = vmatprep.mubr.bf16.mxu0 0
  %227 = vmatmul.mubr.bf16.gmra.mrb[0].mxu0 %v100
  %v228 = vpop.f32.mrb[0].mxu0
  %v229 = vadd.f32 %v52, %v228
  %v230 = vpop.f32.mrb[0].mxu0
  %v231 = vpop.f32.mrb[0].mxu0
  %v232 = vadd.f32 %v52, %v231
  %v233 = vpop.f32.mrb[0].mxu0
  %234 = vmatprep.mubr.bf16.mxu0 0
  %235 = vmatmul.mubr.bf16.gmra.mrb[0].mxu0 %v103
  %v236 = vpop.f32.mrb[0].mxu0
  %v237 = vadd.f32 %v52, %v236
  %v238 = vpop.f32.mrb[0].mxu0
  %v239 = vpop.f32.mrb[0].mxu0
  %v240 = vadd.f32 %v52, %v239
  %v241 = vpop.f32.mrb[0].mxu0
  %242 = vdwg.mxu0
  %243 = vst [vmem:[#allocation2] sm:$0xff] %v140
  %244 = vst [vmem:[#allocation2 + $0x8] sm:$0xff] %v142
  %245 = vst [vmem:[#allocation2 + $0x10] sm:$0xff] %v213
  %246 = vst [vmem:[#allocation2 + $0x18] sm:$0xff] %v144
  %247 = vst [vmem:[#allocation2 + $0x20] sm:$0xff] %v146
  %248 = vst [vmem:[#allocation2 + $0x28] sm:$0xff] %v216
  %249 = vst [vmem:[#allocation2 + $0x30] sm:$0xff] %v150
  %250 = vst [vmem:[#allocation2 + $0x38] sm:$0xff] %v152
  %251 = vst [vmem:[#allocation2 + $0x40] sm:$0xff] %v221
  %252 = vst [vmem:[#allocation2 + $0x48] sm:$0xff] %v154
  %253 = vst [vmem:[#allocation2 + $0x50] sm:$0xff] %v156
  %254 = vst [vmem:[#allocation2 + $0x58] sm:$0xff] %v224
  %255 = vst [vmem:[#allocation2 + $0x60] sm:$0xff] %v160
  %256 = vst [vmem:[#allocation2 + $0x68] sm:$0xff] %v162
  %257 = vst [vmem:[#allocation2 + $0x70] sm:$0xff] %v229
  %258 = vst [vmem:[#allocation2 + $0x78] sm:$0xff] %v164
  %259 = vst [vmem:[#allocation2 + $0x80] sm:$0xff] %v166
  %260 = vst [vmem:[#allocation2 + $0x88] sm:$0xff] %v232
  %261 = vst [vmem:[#allocation2 + $0x90] sm:$0xff] %v170
  %262 = vst [vmem:[#allocation2 + $0x98] sm:$0xff] %v172
  %263 = vst [vmem:[#allocation2 + $0xa0] sm:$0xff] %v237
  %264 = vst [vmem:[#allocation2 + $0xa8] sm:$0xff] %v174
  %265 = vst [vmem:[#allocation2 + $0xb0] sm:$0xff] %v176
  %266 = vst [vmem:[#allocation2 + $0xb8] sm:$0xff] %v240
  %v267 = vld [vmem:[%s4] sm:$0x1]
  %v269 = vlaneseq
  %v270 = vshrl.u32 %v269, 7
  %v271 = vsub.s32 0, %v270
  %v272 = vrot.slane %v267, %v271
  %s274 = smul.u32 0, 3
  %s275 = smul.addr %s274, 8
  %s276 = scalar_lea.vmem [#allocation2], %s275
  %v277 = vld [vmem:[%s276] sm:$0xff]
  %v278 = vld [vmem:[%s276 + $0x8] sm:$0xff]
  %v279 = vld [vmem:[%s276 + $0x10] sm:$0xff]
  %v280 = vld [vmem:[%s2] sm:$0xff]
  %v281 = vld [vmem:[%s2 + $0x8] sm:$0xf]
  %v282 = vld [vmem:[%s2 + $0xc] sm:$0xff]
  %v283 = vld [vmem:[%s2 + $0x14] sm:$0xf]
  %v284 = vld [vmem:[%s2 + $0x18] sm:$0xff]
  %v285 = vld [vmem:[%s2 + $0x20] sm:$0xf]
  %v286 = vld [vmem:[%s2 + $0x24] sm:$0xff]
  %v287 = vld [vmem:[%s2 + $0x2c] sm:$0xf]
  %v288 = vld [vmem:[%s2 + $0x30] sm:$0xff]
  %v289 = vld [vmem:[%s2 + $0x38] sm:$0xf]
  %v290 = vld [vmem:[%s2 + $0x3c] sm:$0xff]
  %v291 = vld [vmem:[%s2 + $0x44] sm:$0xf]
  %v292 = vld [vmem:[%s2 + $0x48] sm:$0xff]
  %v293 = vld [vmem:[%s2 + $0x50] sm:$0xf]
  %v294 = vld [vmem:[%s2 + $0x54] sm:$0xff]
  %v295 = vld [vmem:[%s2 + $0x5c] sm:$0xf]
  %v296 = vld [vmem:[%s2 + $0x60] sm:$0xff]
  %v297 = vld [vmem:[%s2 + $0x68] sm:$0xf]
  %v298 = vld [vmem:[%s2 + $0x6c] sm:$0xff]
  %v299 = vld [vmem:[%s2 + $0x74] sm:$0xf]
  %v300 = vld [vmem:[%s2 + $0x78] sm:$0xff]
  %v301 = vld [vmem:[%s2 + $0x80] sm:$0xf]
  %v302 = vld [vmem:[%s2 + $0x84] sm:$0xff]
  %v303 = vld [vmem:[%s2 + $0x8c] sm:$0xf]
  %v304 = vld [vmem:[%s2 + $0x90] sm:$0xff]
  %v305 = vld [vmem:[%s2 + $0x98] sm:$0xf]
  %v306 = vld [vmem:[%s2 + $0x9c] sm:$0xff]
  %v307 = vld [vmem:[%s2 + $0xa4] sm:$0xf]
  %v308 = vld [vmem:[%s2 + $0xa8] sm:$0xff]
  %v309 = vld [vmem:[%s2 + $0xb0] sm:$0xf]
  %v310 = vld [vmem:[%s2 + $0xb4] sm:$0xff]
  %v311 = vld [vmem:[%s2 + $0xbc] sm:$0xf]
  %v344 = vunpack.c.l.b16 %v280
  %v345 = vunpack.c.h.b16 %v280
  %v346 = vunpack.c.l.b16 %v281
  %v347 = vunpack.c.l.b16 %v282
  %v348 = vunpack.c.h.b16 %v282
  %v349 = vunpack.c.l.b16 %v283
  %v350 = vunpack.c.l.b16 %v284
  %v351 = vunpack.c.h.b16 %v284
  %v352 = vunpack.c.l.b16 %v285
  %v353 = vunpack.c.l.b16 %v286
  %v354 = vunpack.c.h.b16 %v286
  %v355 = vunpack.c.l.b16 %v287
  %v356 = vunpack.c.l.b16 %v288
  %v357 = vunpack.c.h.b16 %v288
  %v358 = vunpack.c.l.b16 %v289
  %v359 = vunpack.c.l.b16 %v290
  %v360 = vunpack.c.h.b16 %v290
  %v361 = vunpack.c.l.b16 %v291
  %v362 = vunpack.c.l.b16 %v292
  %v363 = vunpack.c.h.b16 %v292
  %v364 = vunpack.c.l.b16 %v293
  %v365 = vunpack.c.l.b16 %v294
  %v366 = vunpack.c.h.b16 %v294
  %v367 = vunpack.c.l.b16 %v295
  %v368 = vunpack.c.l.b16 %v296
  %v369 = vunpack.c.h.b16 %v296
  %v370 = vunpack.c.l.b16 %v297
  %v371 = vunpack.c.l.b16 %v298
  %v372 = vunpack.c.h.b16 %v298
  %v373 = vunpack.c.l.b16 %v299
  %v374 = vunpack.c.l.b16 %v300
  %v375 = vunpack.c.h.b16 %v300
  %v376 = vunpack.c.l.b16 %v301
  %v377 = vunpack.c.l.b16 %v302
  %v378 = vunpack.c.h.b16 %v302
  %v379 = vunpack.c.l.b16 %v303
  %v380 = vunpack.c.l.b16 %v304
  %v381 = vunpack.c.h.b16 %v304
  %v382 = vunpack.c.l.b16 %v305
  %v383 = vunpack.c.l.b16 %v306
  %v384 = vunpack.c.h.b16 %v306
  %v385 = vunpack.c.l.b16 %v307
  %v386 = vunpack.c.l.b16 %v308
  %v387 = vunpack.c.h.b16 %v308
  %v388 = vunpack.c.l.b16 %v309
  %v389 = vunpack.c.l.b16 %v310
  %v390 = vunpack.c.h.b16 %v310
  %v391 = vunpack.c.l.b16 %v311
  %v392 = vpack.c.b16 %v347, %v344
  %v393 = vpack.c.b16 %v348, %v345
  %v394 = vpack.c.b16 %v349, %v346
  %v395 = vpack.c.b16 %v353, %v350
  %v396 = vpack.c.b16 %v354, %v351
  %v397 = vpack.c.b16 %v355, %v352
  %v398 = vpack.c.b16 %v359, %v356
  %v399 = vpack.c.b16 %v360, %v357
  %v400 = vpack.c.b16 %v361, %v358
  %v401 = vpack.c.b16 %v365, %v362
  %v402 = vpack.c.b16 %v366, %v363
  %v403 = vpack.c.b16 %v367, %v364
  %v404 = vpack.c.b16 %v371, %v368
  %v405 = vpack.c.b16 %v372, %v369
  %v406 = vpack.c.b16 %v373, %v370
  %v407 = vpack.c.b16 %v377, %v374
  %v408 = vpack.c.b16 %v378, %v375
  %v409 = vpack.c.b16 %v379, %v376
  %v410 = vpack.c.b16 %v383, %v380
  %v411 = vpack.c.b16 %v384, %v381
  %v412 = vpack.c.b16 %v385, %v382
  %v413 = vpack.c.b16 %v389, %v386
  %v414 = vpack.c.b16 %v390, %v387
  %v415 = vpack.c.b16 %v391, %v388
  %440 = vmatprep.subr.bf16.mxu0 %v393
  %441 = vmatpush1.bf16.msra.mxu0 %v392
  %442 = vmatprep.subr.bf16.mxu0 %v396
  %443 = vmatpush1.bf16.msra.mxu0 %v395
  %444 = vmatprep.subr.bf16.mxu0 %v399
  %445 = vmatpush1.bf16.msra.mxu0 %v398
  %446 = vmatprep.subr.bf16.mxu0 %v402
  %447 = vmatpush1.bf16.msra.mxu0 %v401
  %448 = vmatprep.subr.bf16.mxu0 %v405
  %449 = vmatpush1.bf16.msra.mxu0 %v404
  %450 = vmatprep.subr.bf16.mxu0 %v408
  %451 = vmatpush1.bf16.msra.mxu0 %v407
  %452 = vmatprep.subr.bf16.mxu0 %v411
  %453 = vmatpush1.bf16.msra.mxu0 %v410
  %454 = vmatprep.subr.bf16.mxu0 %v414
  %455 = vmatpush1.bf16.msra.mxu0 %v413
  %456 = vmatprep.subr.bf16.mxu0 0
  %457 = vmatpush1.bf16.msra.mxu0 0
  %458 = vmatprep.subr.bf16.mxu0 0
  %459 = vmatpush1.bf16.msra.mxu0 0
  %460 = vmatprep.subr.bf16.mxu0 0
  %461 = vmatpush1.bf16.msra.mxu0 0
  %462 = vmatprep.subr.bf16.mxu0 0
  %463 = vmatpush1.bf16.msra.mxu0 0
  %464 = vmatprep.subr.bf16.mxu0 0
  %465 = vmatpush1.bf16.msra.mxu0 0
  %466 = vmatprep.subr.bf16.mxu0 0
  %467 = vmatpush1.bf16.msra.mxu0 0
  %468 = vmatprep.subr.bf16.mxu0 0
  %469 = vmatpush1.bf16.msra.mxu0 0
  %470 = vmatprep.subr.bf16.mxu0 0
  %471 = vmatpush1.bf16.msra.mxu0 0
  %472 = vmatprep.mubr.bf16.mxu0 0
  %473 = vmatmul.mubr.bf16.gmra.mrb[0].mxu0 0
  %v474 = vpop.f32.mrb[0].mxu0
  %v475 = vadd.f32 0.0, %v474
  %v476 = vpop.f32.mrb[0].mxu0
  %v477 = vadd.f32 0.0, %v476
  %v478 = vpop.f32.mrb[0].mxu0
  %v479 = vpop.f32.mrb[0].mxu0
  %480 = vdwg.mxu0
  %481 = vmatprep.subr.bf16.mxu0 0
  %482 = vmatpush1.bf16.msra.mxu0 %v394
  %483 = vmatprep.subr.bf16.mxu0 0
  %484 = vmatpush1.bf16.msra.mxu0 %v397
  %485 = vmatprep.subr.bf16.mxu0 0
  %486 = vmatpush1.bf16.msra.mxu0 %v400
  %487 = vmatprep.subr.bf16.mxu0 0
  %488 = vmatpush1.bf16.msra.mxu0 %v403
  %489 = vmatprep.subr.bf16.mxu0 0
  %490 = vmatpush1.bf16.msra.mxu0 %v406
  %491 = vmatprep.subr.bf16.mxu0 0
  %492 = vmatpush1.bf16.msra.mxu0 %v409
  %493 = vmatprep.subr.bf16.mxu0 0
  %494 = vmatpush1.bf16.msra.mxu0 %v412
  %495 = vmatprep.subr.bf16.mxu0 0
  %496 = vmatpush1.bf16.msra.mxu0 %v415
  %497 = vmatprep.subr.bf16.mxu0 0
  %498 = vmatpush1.bf16.msra.mxu0 0
  %499 = vmatprep.subr.bf16.mxu0 0
  %500 = vmatpush1.bf16.msra.mxu0 0
  %501 = vmatprep.subr.bf16.mxu0 0
  %502 = vmatpush1.bf16.msra.mxu0 0
  %503 = vmatprep.subr.bf16.mxu0 0
  %504 = vmatpush1.bf16.msra.mxu0 0
  %505 = vmatprep.subr.bf16.mxu0 0
  %506 = vmatpush1.bf16.msra.mxu0 0
  %507 = vmatprep.subr.bf16.mxu0 0
  %508 = vmatpush1.bf16.msra.mxu0 0
  %509 = vmatprep.subr.bf16.mxu0 0
  %510 = vmatpush1.bf16.msra.mxu0 0
  %511 = vmatprep.subr.bf16.mxu0 0
  %512 = vmatpush1.bf16.msra.mxu0 0
  %513 = vmatprep.mubr.bf16.mxu0 0
  %514 = vmatmul.mubr.bf16.gmra.mrb[0].mxu0 0
  %v515 = vpop.f32.mrb[0].mxu0
  %v516 = vadd.f32 0.0, %v515
  %v517 = vpop.f32.mrb[0].mxu0
  %v518 = vpop.f32.mrb[0].mxu0
  %v519 = vpop.f32.mrb[0].mxu0
  %520 = vdwg.mxu0
  %v521 = vadd.f32 %v277, %v475
  %v522 = vadd.f32 %v278, %v477
  %v523 = vxor.u32 %v521, 2147483648
  %v524 = vxor.u32 %v522, 2147483648
  %v525 = vmul.f32 %v523, 1.442695
  %v526 = vpow.pop %v525
  %v527 = vmul.f32 %v524, 1.442695
  %v528 = vpow.pop %v527
  %v529 = vadd.f32 %v526, 1.0
  %v530 = vadd.f32 %v528, 1.0
  %v531 = vrcp.pop %v529
  %v532 = vmul.f32 1.0, %v531
  %v533 = vrcp.pop %v530
  %v534 = vmul.f32 1.0, %v533
  %v535 = vadd.f32 %v516, %v272
  %v536 = vmul.f32 %v532, %v535
  %v537 = vadd.f32 %v279, %v536
  %v538 = vtanh.pop %v537
  %v539 = vsub.f32 1.0, %v534
  %v540 = vmul.f32 %v539, %v538
  %v541 = vmul.f32 %v534, 0.0
  %v542 = vadd.f32 %v540, %v541
  %s543 = smul.u32 1, 3
  %s544 = smul.addr %s543, 8
  %s545 = scalar_lea.vmem [#allocation2], %s544
  %v546 = vld [vmem:[%s545] sm:$0xff]
  %v547 = vld [vmem:[%s545 + $0x8] sm:$0xff]
  %v548 = vld [vmem:[%s545 + $0x10] sm:$0xff]
  %v549 = vpack.c.bf16 %v542, %v542
  %550 = vmatprep.subr.bf16.mxu0 %v393
  %551 = vmatpush1.bf16.msra.mxu0 %v392
  %552 = vmatprep.subr.bf16.mxu0 %v396
  %553 = vmatpush1.bf16.msra.mxu0 %v395
  %554 = vmatprep.subr.bf16.mxu0 %v399
  %555 = vmatpush1.bf16.msra.mxu0 %v398
  %556 = vmatprep.subr.bf16.mxu0 %v402
  %557 = vmatpush1.bf16.msra.mxu0 %v401
  %558 = vmatprep.subr.bf16.mxu0 %v405
  %559 = vmatpush1.bf16.msra.mxu0 %v404
  %560 = vmatprep.subr.bf16.mxu0 %v408
  %561 = vmatpush1.bf16.msra.mxu0 %v407
  %562 = vmatprep.subr.bf16.mxu0 %v411
  %563 = vmatpush1.bf16.msra.mxu0 %v410
  %564 = vmatprep.subr.bf16.mxu0 %v414
  %565 = vmatpush1.bf16.msra.mxu0 %v413
  %566 = vmatprep.subr.bf16.mxu0 0
  %567 = vmatpush1.bf16.msra.mxu0 0
  %568 = vmatprep.subr.bf16.mxu0 0
  %569 = vmatpush1.bf16.msra.mxu0 0
  %570 = vmatprep.subr.bf16.mxu0 0
  %571 = vmatpush1.bf16.msra.mxu0 0
  %572 = vmatprep.subr.bf16.mxu0 0
  %573 = vmatpush1.bf16.msra.mxu0 0
  %574 = vmatprep.subr.bf16.mxu0 0
  %575 = vmatpush1.bf16.msra.mxu0 0
  %576 = vmatprep.subr.bf16.mxu0 0
  %577 = vmatpush1.bf16.msra.mxu0 0
  %578 = vmatprep.subr.bf16.mxu0 0
  %579 = vmatpush1.bf16.msra.mxu0 0
  %580 = vmatprep.subr.bf16.mxu0 0
  %581 = vmatpush1.bf16.msra.mxu0 0
  %582 = vmatprep.mubr.bf16.mxu0 0
  %583 = vmatmul.mubr.bf16.gmra.mrb[0].mxu0 %v549
  %v584 = vpop.f32.mrb[0].mxu0
  %v585 = vadd.f32 0.0, %v584
  %v586 = vpop.f32.mrb[0].mxu0
  %v587 = vadd.f32 0.0, %v586
  %v588 = vpop.f32.mrb[0].mxu0
  %v589 = vpop.f32.mrb[0].mxu0
  %590 = vdwg.mxu0
  %591 = vmatprep.subr.bf16.mxu0 0
  %592 = vmatpush1.bf16.msra.mxu0 %v394
  %593 = vmatprep.subr.bf16.mxu0 0
  %594 = vmatpush1.bf16.msra.mxu0 %v397
  %595 = vmatprep.subr.bf16.mxu0 0
  %596 = vmatpush1.bf16.msra.mxu0 %v400
  %597 = vmatprep.subr.bf16.mxu0 0
  %598 = vmatpush1.bf16.msra.mxu0 %v403
  %599 = vmatprep.subr.bf16.mxu0 0
  %600 = vmatpush1.bf16.msra.mxu0 %v406
  %601 = vmatprep.subr.bf16.mxu0 0
  %602 = vmatpush1.bf16.msra.mxu0 %v409
  %603 = vmatprep.subr.bf16.mxu0 0
  %604 = vmatpush1.bf16.msra.mxu0 %v412
  %605 = vmatprep.subr.bf16.mxu0 0
  %606 = vmatpush1.bf16.msra.mxu0 %v415
  %607 = vmatprep.subr.bf16.mxu0 0
  %608 = vmatpush1.bf16.msra.mxu0 0
  %609 = vmatprep.subr.bf16.mxu0 0
  %610 = vmatpush1.bf16.msra.mxu0 0
  %611 = vmatprep.subr.bf16.mxu0 0
  %612 = vmatpush1.bf16.msra.mxu0 0
  %613 = vmatprep.subr.bf16.mxu0 0
  %614 = vmatpush1.bf16.msra.mxu0 0
  %615 = vmatprep.subr.bf16.mxu0 0
  %616 = vmatpush1.bf16.msra.mxu0 0
  %617 = vmatprep.subr.bf16.mxu0 0
  %618 = vmatpush1.bf16.msra.mxu0 0
  %619 = vmatprep.subr.bf16.mxu0 0
  %620 = vmatpush1.bf16.msra.mxu0 0
  %621 = vmatprep.subr.bf16.mxu0 0
  %622 = vmatpush1.bf16.msra.mxu0 0
  %623 = vmatprep.mubr.bf16.mxu0 0
  %624 = vmatmul.mubr.bf16.gmra.mrb[0].mxu0 %v549
  %v625 = vpop.f32.mrb[0].mxu0
  %v626 = vadd.f32 0.0, %v625
  %v627 = vpop.f32.mrb[0].mxu0
  %v628 = vpop.f32.mrb[0].mxu0
  %v629 = vpop.f32.mrb[0].mxu0
  %630 = vdwg.mxu0
  %v631 = vadd.f32 %v546, %v585
  %v632 = vadd.f32 %v547, %v587
  %v633 = vxor.u32 %v631, 2147483648
  %v634 = vxor.u32 %v632, 2147483648
  %v635 = vmul.f32 %v633, 1.442695
  %v636 = vpow.pop %v635
  %v637 = vmul.f32 %v634, 1.442695
  %v638 = vpow.pop %v637
  %v639 = vadd.f32 %v636, 1.0
  %v640 = vadd.f32 %v638, 1.0
  %v641 = vrcp.pop %v639
  %v642 = vmul.f32 1.0, %v641
  %v643 = vrcp.pop %v640
  %v644 = vmul.f32 1.0, %v643
  %v645 = vadd.f32 %v626, %v272
  %v646 = vmul.f32 %v642, %v645
  %v647 = vadd.f32 %v548, %v646
  %v648 = vtanh.pop %v647
  %v649 = vsub.f32 1.0, %v644
  %v650 = vmul.f32 %v649, %v648
  %v651 = vmul.f32 %v644, %v542
  %v652 = vadd.f32 %v650, %v651
  %s653 = smul.u32 2, 3
  %s654 = smul.addr %s653, 8
  %s655 = scalar_lea.vmem [#allocation2], %s654
  %v656 = vld [vmem:[%s655] sm:$0xff]
  %v657 = vld [vmem:[%s655 + $0x8] sm:$0xff]
  %v658 = vld [vmem:[%s655 + $0x10] sm:$0xff]
  %v659 = vpack.c.bf16 %v652, %v652
  %660 = vmatprep.subr.bf16.mxu0 %v393
  %661 = vmatpush1.bf16.msra.mxu0 %v392
  %662 = vmatprep.subr.bf16.mxu0 %v396
  %663 = vmatpush1.bf16.msra.mxu0 %v395
  %664 = vmatprep.subr.bf16.mxu0 %v399
  %665 = vmatpush1.bf16.msra.mxu0 %v398
  %666 = vmatprep.subr.bf16.mxu0 %v402
  %667 = vmatpush1.bf16.msra.mxu0 %v401
  %668 = vmatprep.subr.bf16.mxu0 %v405
  %669 = vmatpush1.bf16.msra.mxu0 %v404
  %670 = vmatprep.subr.bf16.mxu0 %v408
  %671 = vmatpush1.bf16.msra.mxu0 %v407
  %672 = vmatprep.subr.bf16.mxu0 %v411
  %673 = vmatpush1.bf16.msra.mxu0 %v410
  %674 = vmatprep.subr.bf16.mxu0 %v414
  %675 = vmatpush1.bf16.msra.mxu0 %v413
  %676 = vmatprep.subr.bf16.mxu0 0
  %677 = vmatpush1.bf16.msra.mxu0 0
  %678 = vmatprep.subr.bf16.mxu0 0
  %679 = vmatpush1.bf16.msra.mxu0 0
  %680 = vmatprep.subr.bf16.mxu0 0
  %681 = vmatpush1.bf16.msra.mxu0 0
  %682 = vmatprep.subr.bf16.mxu0 0
  %683 = vmatpush1.bf16.msra.mxu0 0
  %684 = vmatprep.subr.bf16.mxu0 0
  %685 = vmatpush1.bf16.msra.mxu0 0
  %686 = vmatprep.subr.bf16.mxu0 0
  %687 = vmatpush1.bf16.msra.mxu0 0
  %688 = vmatprep.subr.bf16.mxu0 0
  %689 = vmatpush1.bf16.msra.mxu0 0
  %690 = vmatprep.subr.bf16.mxu0 0
  %691 = vmatpush1.bf16.msra.mxu0 0
  %692 = vmatprep.mubr.bf16.mxu0 0
  %693 = vmatmul.mubr.bf16.gmra.mrb[0].mxu0 %v659
  %v694 = vpop.f32.mrb[0].mxu0
  %v695 = vadd.f32 0.0, %v694
  %v696 = vpop.f32.mrb[0].mxu0
  %v697 = vadd.f32 0.0, %v696
  %v698 = vpop.f32.mrb[0].mxu0
  %v699 = vpop.f32.mrb[0].mxu0
  %700 = vdwg.mxu0
  %701 = vmatprep.subr.bf16.mxu0 0
  %702 = vmatpush1.bf16.msra.mxu0 %v394
  %703 = vmatprep.subr.bf16.mxu0 0
  %704 = vmatpush1.bf16.msra.mxu0 %v397
  %705 = vmatprep.subr.bf16.mxu0 0
  %706 = vmatpush1.bf16.msra.mxu0 %v400
  %707 = vmatprep.subr.bf16.mxu0 0
  %708 = vmatpush1.bf16.msra.mxu0 %v403
  %709 = vmatprep.subr.bf16.mxu0 0
  %710 = vmatpush1.bf16.msra.mxu0 %v406
  %711 = vmatprep.subr.bf16.mxu0 0
  %712 = vmatpush1.bf16.msra.mxu0 %v409
  %713 = vmatprep.subr.bf16.mxu0 0
  %714 = vmatpush1.bf16.msra.mxu0 %v412
  %715 = vmatprep.subr.bf16.mxu0 0
  %716 = vmatpush1.bf16.msra.mxu0 %v415
  %717 = vmatprep.subr.bf16.mxu0 0
  %718 = vmatpush1.bf16.msra.mxu0 0
  %719 = vmatprep.subr.bf16.mxu0 0
  %720 = vmatpush1.bf16.msra.mxu0 0
  %721 = vmatprep.subr.bf16.mxu0 0
  %722 = vmatpush1.bf16.msra.mxu0 0
  %723 = vmatprep.subr.bf16.mxu0 0
  %724 = vmatpush1.bf16.msra.mxu0 0
  %725 = vmatprep.subr.bf16.mxu0 0
  %726 = vmatpush1.bf16.msra.mxu0 0
  %727 = vmatprep.subr.bf16.mxu0 0
  %728 = vmatpush1.bf16.msra.mxu0 0
  %729 = vmatprep.subr.bf16.mxu0 0
  %730 = vmatpush1.bf16.msra.mxu0 0
  %731 = vmatprep.subr.bf16.mxu0 0
  %732 = vmatpush1.bf16.msra.mxu0 0
  %733 = vmatprep.mubr.bf16.mxu0 0
  %734 = vmatmul.mubr.bf16.gmra.mrb[0].mxu0 %v659
  %v735 = vpop.f32.mrb[0].mxu0
  %v736 = vadd.f32 0.0, %v735
  %v737 = vpop.f32.mrb[0].mxu0
  %v738 = vpop.f32.mrb[0].mxu0
  %v739 = vpop.f32.mrb[0].mxu0
  %740 = vdwg.mxu0
  %v741 = vadd.f32 %v656, %v695
  %v742 = vadd.f32 %v657, %v697
  %v743 = vxor.u32 %v741, 2147483648
  %v744 = vxor.u32 %v742, 2147483648
  %v745 = vmul.f32 %v743, 1.442695
  %v746 = vpow.pop %v745
  %v747 = vmul.f32 %v744, 1.442695
  %v748 = vpow.pop %v747
  %v749 = vadd.f32 %v746, 1.0
  %v750 = vadd.f32 %v748, 1.0
  %v751 = vrcp.pop %v749
  %v752 = vmul.f32 1.0, %v751
  %v753 = vrcp.pop %v750
  %v754 = vmul.f32 1.0, %v753
  %v755 = vadd.f32 %v736, %v272
  %v756 = vmul.f32 %v752, %v755
  %v757 = vadd.f32 %v658, %v756
  %v758 = vtanh.pop %v757
  %v759 = vsub.f32 1.0, %v754
  %v760 = vmul.f32 %v759, %v758
  %v761 = vmul.f32 %v754, %v652
  %v762 = vadd.f32 %v760, %v761
  %s763 = smul.u32 3, 3
  %s764 = smul.addr %s763, 8
  %s765 = scalar_lea.vmem [#allocation2], %s764
  %v766 = vld [vmem:[%s765] sm:$0xff]
  %v767 = vld [vmem:[%s765 + $0x8] sm:$0xff]
  %v768 = vld [vmem:[%s765 + $0x10] sm:$0xff]
  %v769 = vpack.c.bf16 %v762, %v762
  %770 = vmatprep.subr.bf16.mxu0 %v393
  %771 = vmatpush1.bf16.msra.mxu0 %v392
  %772 = vmatprep.subr.bf16.mxu0 %v396
  %773 = vmatpush1.bf16.msra.mxu0 %v395
  %774 = vmatprep.subr.bf16.mxu0 %v399
  %775 = vmatpush1.bf16.msra.mxu0 %v398
  %776 = vmatprep.subr.bf16.mxu0 %v402
  %777 = vmatpush1.bf16.msra.mxu0 %v401
  %778 = vmatprep.subr.bf16.mxu0 %v405
  %779 = vmatpush1.bf16.msra.mxu0 %v404
  %780 = vmatprep.subr.bf16.mxu0 %v408
  %781 = vmatpush1.bf16.msra.mxu0 %v407
  %782 = vmatprep.subr.bf16.mxu0 %v411
  %783 = vmatpush1.bf16.msra.mxu0 %v410
  %784 = vmatprep.subr.bf16.mxu0 %v414
  %785 = vmatpush1.bf16.msra.mxu0 %v413
  %786 = vmatprep.subr.bf16.mxu0 0
  %787 = vmatpush1.bf16.msra.mxu0 0
  %788 = vmatprep.subr.bf16.mxu0 0
  %789 = vmatpush1.bf16.msra.mxu0 0
  %790 = vmatprep.subr.bf16.mxu0 0
  %791 = vmatpush1.bf16.msra.mxu0 0
  %792 = vmatprep.subr.bf16.mxu0 0
  %793 = vmatpush1.bf16.msra.mxu0 0
  %794 = vmatprep.subr.bf16.mxu0 0
  %795 = vmatpush1.bf16.msra.mxu0 0
  %796 = vmatprep.subr.bf16.mxu0 0
  %797 = vmatpush1.bf16.msra.mxu0 0
  %798 = vmatprep.subr.bf16.mxu0 0
  %799 = vmatpush1.bf16.msra.mxu0 0
  %800 = vmatprep.subr.bf16.mxu0 0
  %801 = vmatpush1.bf16.msra.mxu0 0
  %802 = vmatprep.mubr.bf16.mxu0 0
  %803 = vmatmul.mubr.bf16.gmra.mrb[0].mxu0 %v769
  %v804 = vpop.f32.mrb[0].mxu0
  %v805 = vadd.f32 0.0, %v804
  %v806 = vpop.f32.mrb[0].mxu0
  %v807 = vadd.f32 0.0, %v806
  %v808 = vpop.f32.mrb[0].mxu0
  %v809 = vpop.f32.mrb[0].mxu0
  %810 = vdwg.mxu0
  %811 = vmatprep.subr.bf16.mxu0 0
  %812 = vmatpush1.bf16.msra.mxu0 %v394
  %813 = vmatprep.subr.bf16.mxu0 0
  %814 = vmatpush1.bf16.msra.mxu0 %v397
  %815 = vmatprep.subr.bf16.mxu0 0
  %816 = vmatpush1.bf16.msra.mxu0 %v400
  %817 = vmatprep.subr.bf16.mxu0 0
  %818 = vmatpush1.bf16.msra.mxu0 %v403
  %819 = vmatprep.subr.bf16.mxu0 0
  %820 = vmatpush1.bf16.msra.mxu0 %v406
  %821 = vmatprep.subr.bf16.mxu0 0
  %822 = vmatpush1.bf16.msra.mxu0 %v409
  %823 = vmatprep.subr.bf16.mxu0 0
  %824 = vmatpush1.bf16.msra.mxu0 %v412
  %825 = vmatprep.subr.bf16.mxu0 0
  %826 = vmatpush1.bf16.msra.mxu0 %v415
  %827 = vmatprep.subr.bf16.mxu0 0
  %828 = vmatpush1.bf16.msra.mxu0 0
  %829 = vmatprep.subr.bf16.mxu0 0
  %830 = vmatpush1.bf16.msra.mxu0 0
  %831 = vmatprep.subr.bf16.mxu0 0
  %832 = vmatpush1.bf16.msra.mxu0 0
  %833 = vmatprep.subr.bf16.mxu0 0
  %834 = vmatpush1.bf16.msra.mxu0 0
  %835 = vmatprep.subr.bf16.mxu0 0
  %836 = vmatpush1.bf16.msra.mxu0 0
  %837 = vmatprep.subr.bf16.mxu0 0
  %838 = vmatpush1.bf16.msra.mxu0 0
  %839 = vmatprep.subr.bf16.mxu0 0
  %840 = vmatpush1.bf16.msra.mxu0 0
  %841 = vmatprep.subr.bf16.mxu0 0
  %842 = vmatpush1.bf16.msra.mxu0 0
  %843 = vmatprep.mubr.bf16.mxu0 0
  %844 = vmatmul.mubr.bf16.gmra.mrb[0].mxu0 %v769
  %v845 = vpop.f32.mrb[0].mxu0
  %v846 = vadd.f32 0.0, %v845
  %v847 = vpop.f32.mrb[0].mxu0
  %v848 = vpop.f32.mrb[0].mxu0
  %v849 = vpop.f32.mrb[0].mxu0
  %850 = vdwg.mxu0
  %v851 = vadd.f32 %v766, %v805
  %v852 = vadd.f32 %v767, %v807
  %v853 = vxor.u32 %v851, 2147483648
  %v854 = vxor.u32 %v852, 2147483648
  %v855 = vmul.f32 %v853, 1.442695
  %v856 = vpow.pop %v855
  %v857 = vmul.f32 %v854, 1.442695
  %v858 = vpow.pop %v857
  %v859 = vadd.f32 %v856, 1.0
  %v860 = vadd.f32 %v858, 1.0
  %v861 = vrcp.pop %v859
  %v862 = vmul.f32 1.0, %v861
  %v863 = vrcp.pop %v860
  %v864 = vmul.f32 1.0, %v863
  %v865 = vadd.f32 %v846, %v272
  %v866 = vmul.f32 %v862, %v865
  %v867 = vadd.f32 %v768, %v866
  %v868 = vtanh.pop %v867
  %v869 = vsub.f32 1.0, %v864
  %v870 = vmul.f32 %v869, %v868
  %v871 = vmul.f32 %v864, %v762
  %v872 = vadd.f32 %v870, %v871
  %s873 = smul.u32 4, 3
  %s874 = smul.addr %s873, 8
  %s875 = scalar_lea.vmem [#allocation2], %s874
  %v876 = vld [vmem:[%s875] sm:$0xff]
  %v877 = vld [vmem:[%s875 + $0x8] sm:$0xff]
  %v878 = vld [vmem:[%s875 + $0x10] sm:$0xff]
  %v879 = vpack.c.bf16 %v872, %v872
  %880 = vmatprep.subr.bf16.mxu0 %v393
  %881 = vmatpush1.bf16.msra.mxu0 %v392
  %882 = vmatprep.subr.bf16.mxu0 %v396
  %883 = vmatpush1.bf16.msra.mxu0 %v395
  %884 = vmatprep.subr.bf16.mxu0 %v399
  %885 = vmatpush1.bf16.msra.mxu0 %v398
  %886 = vmatprep.subr.bf16.mxu0 %v402
  %887 = vmatpush1.bf16.msra.mxu0 %v401
  %888 = vmatprep.subr.bf16.mxu0 %v405
  %889 = vmatpush1.bf16.msra.mxu0 %v404
  %890 = vmatprep.subr.bf16.mxu0 %v408
  %891 = vmatpush1.bf16.msra.mxu0 %v407
  %892 = vmatprep.subr.bf16.mxu0 %v411
  %893 = vmatpush1.bf16.msra.mxu0 %v410
  %894 = vmatprep.subr.bf16.mxu0 %v414
  %895 = vmatpush1.bf16.msra.mxu0 %v413
  %896 = vmatprep.subr.bf16.mxu0 0
  %897 = vmatpush1.bf16.msra.mxu0 0
  %898 = vmatprep.subr.bf16.mxu0 0
  %899 = vmatpush1.bf16.msra.mxu0 0
  %900 = vmatprep.subr.bf16.mxu0 0
  %901 = vmatpush1.bf16.msra.mxu0 0
  %902 = vmatprep.subr.bf16.mxu0 0
  %903 = vmatpush1.bf16.msra.mxu0 0
  %904 = vmatprep.subr.bf16.mxu0 0
  %905 = vmatpush1.bf16.msra.mxu0 0
  %906 = vmatprep.subr.bf16.mxu0 0
  %907 = vmatpush1.bf16.msra.mxu0 0
  %908 = vmatprep.subr.bf16.mxu0 0
  %909 = vmatpush1.bf16.msra.mxu0 0
  %910 = vmatprep.subr.bf16.mxu0 0
  %911 = vmatpush1.bf16.msra.mxu0 0
  %912 = vmatprep.mubr.bf16.mxu0 0
  %913 = vmatmul.mubr.bf16.gmra.mrb[0].mxu0 %v879
  %v914 = vpop.f32.mrb[0].mxu0
  %v915 = vadd.f32 0.0, %v914
  %v916 = vpop.f32.mrb[0].mxu0
  %v917 = vadd.f32 0.0, %v916
  %v918 = vpop.f32.mrb[0].mxu0
  %v919 = vpop.f32.mrb[0].mxu0
  %920 = vdwg.mxu0
  %921 = vmatprep.subr.bf16.mxu0 0
  %922 = vmatpush1.bf16.msra.mxu0 %v394
  %923 = vmatprep.subr.bf16.mxu0 0
  %924 = vmatpush1.bf16.msra.mxu0 %v397
  %925 = vmatprep.subr.bf16.mxu0 0
  %926 = vmatpush1.bf16.msra.mxu0 %v400
  %927 = vmatprep.subr.bf16.mxu0 0
  %928 = vmatpush1.bf16.msra.mxu0 %v403
  %929 = vmatprep.subr.bf16.mxu0 0
  %930 = vmatpush1.bf16.msra.mxu0 %v406
  %931 = vmatprep.subr.bf16.mxu0 0
  %932 = vmatpush1.bf16.msra.mxu0 %v409
  %933 = vmatprep.subr.bf16.mxu0 0
  %934 = vmatpush1.bf16.msra.mxu0 %v412
  %935 = vmatprep.subr.bf16.mxu0 0
  %936 = vmatpush1.bf16.msra.mxu0 %v415
  %937 = vmatprep.subr.bf16.mxu0 0
  %938 = vmatpush1.bf16.msra.mxu0 0
  %939 = vmatprep.subr.bf16.mxu0 0
  %940 = vmatpush1.bf16.msra.mxu0 0
  %941 = vmatprep.subr.bf16.mxu0 0
  %942 = vmatpush1.bf16.msra.mxu0 0
  %943 = vmatprep.subr.bf16.mxu0 0
  %944 = vmatpush1.bf16.msra.mxu0 0
  %945 = vmatprep.subr.bf16.mxu0 0
  %946 = vmatpush1.bf16.msra.mxu0 0
  %947 = vmatprep.subr.bf16.mxu0 0
  %948 = vmatpush1.bf16.msra.mxu0 0
  %949 = vmatprep.subr.bf16.mxu0 0
  %950 = vmatpush1.bf16.msra.mxu0 0
  %951 = vmatprep.subr.bf16.mxu0 0
  %952 = vmatpush1.bf16.msra.mxu0 0
  %953 = vmatprep.mubr.bf16.mxu0 0
  %954 = vmatmul.mubr.bf16.gmra.mrb[0].mxu0 %v879
  %v955 = vpop.f32.mrb[0].mxu0
  %v956 = vadd.f32 0.0, %v955
  %v957 = vpop.f32.mrb[0].mxu0
  %v958 = vpop.f32.mrb[0].mxu0
  %v959 = vpop.f32.mrb[0].mxu0
  %960 = vdwg.mxu0
  %v961 = vadd.f32 %v876, %v915
  %v962 = vadd.f32 %v877, %v917
  %v963 = vxor.u32 %v961, 2147483648
  %v964 = vxor.u32 %v962, 2147483648
  %v965 = vmul.f32 %v963, 1.442695
  %v966 = vpow.pop %v965
  %v967 = vmul.f32 %v964, 1.442695
  %v968 = vpow.pop %v967
  %v969 = vadd.f32 %v966, 1.0
  %v970 = vadd.f32 %v968, 1.0
  %v971 = vrcp.pop %v969
  %v972 = vmul.f32 1.0, %v971
  %v973 = vrcp.pop %v970
  %v974 = vmul.f32 1.0, %v973
  %v975 = vadd.f32 %v956, %v272
  %v976 = vmul.f32 %v972, %v975
  %v977 = vadd.f32 %v878, %v976
  %v978 = vtanh.pop %v977
  %v979 = vsub.f32 1.0, %v974
  %v980 = vmul.f32 %v979, %v978
  %v981 = vmul.f32 %v974, %v872
  %v982 = vadd.f32 %v980, %v981
  %s983 = smul.u32 5, 3
  %s984 = smul.addr %s983, 8
  %s985 = scalar_lea.vmem [#allocation2], %s984
  %v986 = vld [vmem:[%s985] sm:$0xff]
  %v987 = vld [vmem:[%s985 + $0x8] sm:$0xff]
  %v988 = vld [vmem:[%s985 + $0x10] sm:$0xff]
  %v989 = vpack.c.bf16 %v982, %v982
  %990 = vmatprep.subr.bf16.mxu0 %v393
  %991 = vmatpush1.bf16.msra.mxu0 %v392
  %992 = vmatprep.subr.bf16.mxu0 %v396
  %993 = vmatpush1.bf16.msra.mxu0 %v395
  %994 = vmatprep.subr.bf16.mxu0 %v399
  %995 = vmatpush1.bf16.msra.mxu0 %v398
  %996 = vmatprep.subr.bf16.mxu0 %v402
  %997 = vmatpush1.bf16.msra.mxu0 %v401
  %998 = vmatprep.subr.bf16.mxu0 %v405
  %999 = vmatpush1.bf16.msra.mxu0 %v404
  %1000 = vmatprep.subr.bf16.mxu0 %v408
  %1001 = vmatpush1.bf16.msra.mxu0 %v407
  %1002 = vmatprep.subr.bf16.mxu0 %v411
  %1003 = vmatpush1.bf16.msra.mxu0 %v410
  %1004 = vmatprep.subr.bf16.mxu0 %v414
  %1005 = vmatpush1.bf16.msra.mxu0 %v413
  %1006 = vmatprep.subr.bf16.mxu0 0
  %1007 = vmatpush1.bf16.msra.mxu0 0
  %1008 = vmatprep.subr.bf16.mxu0 0
  %1009 = vmatpush1.bf16.msra.mxu0 0
  %1010 = vmatprep.subr.bf16.mxu0 0
  %1011 = vmatpush1.bf16.msra.mxu0 0
  %1012 = vmatprep.subr.bf16.mxu0 0
  %1013 = vmatpush1.bf16.msra.mxu0 0
  %1014 = vmatprep.subr.bf16.mxu0 0
  %1015 = vmatpush1.bf16.msra.mxu0 0
  %1016 = vmatprep.subr.bf16.mxu0 0
  %1017 = vmatpush1.bf16.msra.mxu0 0
  %1018 = vmatprep.subr.bf16.mxu0 0
  %1019 = vmatpush1.bf16.msra.mxu0 0
  %1020 = vmatprep.subr.bf16.mxu0 0
  %1021 = vmatpush1.bf16.msra.mxu0 0
  %1022 = vmatprep.mubr.bf16.mxu0 0
  %1023 = vmatmul.mubr.bf16.gmra.mrb[0].mxu0 %v989
  %v1024 = vpop.f32.mrb[0].mxu0
  %v1025 = vadd.f32 0.0, %v1024
  %v1026 = vpop.f32.mrb[0].mxu0
  %v1027 = vadd.f32 0.0, %v1026
  %v1028 = vpop.f32.mrb[0].mxu0
  %v1029 = vpop.f32.mrb[0].mxu0
  %1030 = vdwg.mxu0
  %1031 = vmatprep.subr.bf16.mxu0 0
  %1032 = vmatpush1.bf16.msra.mxu0 %v394
  %1033 = vmatprep.subr.bf16.mxu0 0
  %1034 = vmatpush1.bf16.msra.mxu0 %v397
  %1035 = vmatprep.subr.bf16.mxu0 0
  %1036 = vmatpush1.bf16.msra.mxu0 %v400
  %1037 = vmatprep.subr.bf16.mxu0 0
  %1038 = vmatpush1.bf16.msra.mxu0 %v403
  %1039 = vmatprep.subr.bf16.mxu0 0
  %1040 = vmatpush1.bf16.msra.mxu0 %v406
  %1041 = vmatprep.subr.bf16.mxu0 0
  %1042 = vmatpush1.bf16.msra.mxu0 %v409
  %1043 = vmatprep.subr.bf16.mxu0 0
  %1044 = vmatpush1.bf16.msra.mxu0 %v412
  %1045 = vmatprep.subr.bf16.mxu0 0
  %1046 = vmatpush1.bf16.msra.mxu0 %v415
  %1047 = vmatprep.subr.bf16.mxu0 0
  %1048 = vmatpush1.bf16.msra.mxu0 0
  %1049 = vmatprep.subr.bf16.mxu0 0
  %1050 = vmatpush1.bf16.msra.mxu0 0
  %1051 = vmatprep.subr.bf16.mxu0 0
  %1052 = vmatpush1.bf16.msra.mxu0 0
  %1053 = vmatprep.subr.bf16.mxu0 0
  %1054 = vmatpush1.bf16.msra.mxu0 0
  %1055 = vmatprep.subr.bf16.mxu0 0
  %1056 = vmatpush1.bf16.msra.mxu0 0
  %1057 = vmatprep.subr.bf16.mxu0 0
  %1058 = vmatpush1.bf16.msra.mxu0 0
  %1059 = vmatprep.subr.bf16.mxu0 0
  %1060 = vmatpush1.bf16.msra.mxu0 0
  %1061 = vmatprep.subr.bf16.mxu0 0
  %1062 = vmatpush1.bf16.msra.mxu0 0
  %1063 = vmatprep.mubr.bf16.mxu0 0
  %1064 = vmatmul.mubr.bf16.gmra.mrb[0].mxu0 %v989
  %v1065 = vpop.f32.mrb[0].mxu0
  %v1066 = vadd.f32 0.0, %v1065
  %v1067 = vpop.f32.mrb[0].mxu0
  %v1068 = vpop.f32.mrb[0].mxu0
  %v1069 = vpop.f32.mrb[0].mxu0
  %1070 = vdwg.mxu0
  %v1071 = vadd.f32 %v986, %v1025
  %v1072 = vadd.f32 %v987, %v1027
  %v1073 = vxor.u32 %v1071, 2147483648
  %v1074 = vxor.u32 %v1072, 2147483648
  %v1075 = vmul.f32 %v1073, 1.442695
  %v1076 = vpow.pop %v1075
  %v1077 = vmul.f32 %v1074, 1.442695
  %v1078 = vpow.pop %v1077
  %v1079 = vadd.f32 %v1076, 1.0
  %v1080 = vadd.f32 %v1078, 1.0
  %v1081 = vrcp.pop %v1079
  %v1082 = vmul.f32 1.0, %v1081
  %v1083 = vrcp.pop %v1080
  %v1084 = vmul.f32 1.0, %v1083
  %v1085 = vadd.f32 %v1066, %v272
  %v1086 = vmul.f32 %v1082, %v1085
  %v1087 = vadd.f32 %v988, %v1086
  %v1088 = vtanh.pop %v1087
  %v1089 = vsub.f32 1.0, %v1084
  %v1090 = vmul.f32 %v1089, %v1088
  %v1091 = vmul.f32 %v1084, %v982
  %v1092 = vadd.f32 %v1090, %v1091
  %s1093 = smul.u32 6, 3
  %s1094 = smul.addr %s1093, 8
  %s1095 = scalar_lea.vmem [#allocation2], %s1094
  %v1096 = vld [vmem:[%s1095] sm:$0xff]
  %v1097 = vld [vmem:[%s1095 + $0x8] sm:$0xff]
  %v1098 = vld [vmem:[%s1095 + $0x10] sm:$0xff]
  %v1099 = vpack.c.bf16 %v1092, %v1092
  %1100 = vmatprep.subr.bf16.mxu0 %v393
  %1101 = vmatpush1.bf16.msra.mxu0 %v392
  %1102 = vmatprep.subr.bf16.mxu0 %v396
  %1103 = vmatpush1.bf16.msra.mxu0 %v395
  %1104 = vmatprep.subr.bf16.mxu0 %v399
  %1105 = vmatpush1.bf16.msra.mxu0 %v398
  %1106 = vmatprep.subr.bf16.mxu0 %v402
  %1107 = vmatpush1.bf16.msra.mxu0 %v401
  %1108 = vmatprep.subr.bf16.mxu0 %v405
  %1109 = vmatpush1.bf16.msra.mxu0 %v404
  %1110 = vmatprep.subr.bf16.mxu0 %v408
  %1111 = vmatpush1.bf16.msra.mxu0 %v407
  %1112 = vmatprep.subr.bf16.mxu0 %v411
  %1113 = vmatpush1.bf16.msra.mxu0 %v410
  %1114 = vmatprep.subr.bf16.mxu0 %v414
  %1115 = vmatpush1.bf16.msra.mxu0 %v413
  %1116 = vmatprep.subr.bf16.mxu0 0
  %1117 = vmatpush1.bf16.msra.mxu0 0
  %1118 = vmatprep.subr.bf16.mxu0 0
  %1119 = vmatpush1.bf16.msra.mxu0 0
  %1120 = vmatprep.subr.bf16.mxu0 0
  %1121 = vmatpush1.bf16.msra.mxu0 0
  %1122 = vmatprep.subr.bf16.mxu0 0
  %1123 = vmatpush1.bf16.msra.mxu0 0
  %1124 = vmatprep.subr.bf16.mxu0 0
  %1125 = vmatpush1.bf16.msra.mxu0 0
  %1126 = vmatprep.subr.bf16.mxu0 0
  %1127 = vmatpush1.bf16.msra.mxu0 0
  %1128 = vmatprep.subr.bf16.mxu0 0
  %1129 = vmatpush1.bf16.msra.mxu0 0
  %1130 = vmatprep.subr.bf16.mxu0 0
  %1131 = vmatpush1.bf16.msra.mxu0 0
  %1132 = vmatprep.mubr.bf16.mxu0 0
  %1133 = vmatmul.mubr.bf16.gmra.mrb[0].mxu0 %v1099
  %v1134 = vpop.f32.mrb[0].mxu0
  %v1135 = vadd.f32 0.0, %v1134
  %v1136 = vpop.f32.mrb[0].mxu0
  %v1137 = vadd.f32 0.0, %v1136
  %v1138 = vpop.f32.mrb[0].mxu0
  %v1139 = vpop.f32.mrb[0].mxu0
  %1140 = vdwg.mxu0
  %1141 = vmatprep.subr.bf16.mxu0 0
  %1142 = vmatpush1.bf16.msra.mxu0 %v394
  %1143 = vmatprep.subr.bf16.mxu0 0
  %1144 = vmatpush1.bf16.msra.mxu0 %v397
  %1145 = vmatprep.subr.bf16.mxu0 0
  %1146 = vmatpush1.bf16.msra.mxu0 %v400
  %1147 = vmatprep.subr.bf16.mxu0 0
  %1148 = vmatpush1.bf16.msra.mxu0 %v403
  %1149 = vmatprep.subr.bf16.mxu0 0
  %1150 = vmatpush1.bf16.msra.mxu0 %v406
  %1151 = vmatprep.subr.bf16.mxu0 0
  %1152 = vmatpush1.bf16.msra.mxu0 %v409
  %1153 = vmatprep.subr.bf16.mxu0 0
  %1154 = vmatpush1.bf16.msra.mxu0 %v412
  %1155 = vmatprep.subr.bf16.mxu0 0
  %1156 = vmatpush1.bf16.msra.mxu0 %v415
  %1157 = vmatprep.subr.bf16.mxu0 0
  %1158 = vmatpush1.bf16.msra.mxu0 0
  %1159 = vmatprep.subr.bf16.mxu0 0
  %1160 = vmatpush1.bf16.msra.mxu0 0
  %1161 = vmatprep.subr.bf16.mxu0 0
  %1162 = vmatpush1.bf16.msra.mxu0 0
  %1163 = vmatprep.subr.bf16.mxu0 0
  %1164 = vmatpush1.bf16.msra.mxu0 0
  %1165 = vmatprep.subr.bf16.mxu0 0
  %1166 = vmatpush1.bf16.msra.mxu0 0
  %1167 = vmatprep.subr.bf16.mxu0 0
  %1168 = vmatpush1.bf16.msra.mxu0 0
  %1169 = vmatprep.subr.bf16.mxu0 0
  %1170 = vmatpush1.bf16.msra.mxu0 0
  %1171 = vmatprep.subr.bf16.mxu0 0
  %1172 = vmatpush1.bf16.msra.mxu0 0
  %1173 = vmatprep.mubr.bf16.mxu0 0
  %1174 = vmatmul.mubr.bf16.gmra.mrb[0].mxu0 %v1099
  %v1175 = vpop.f32.mrb[0].mxu0
  %v1176 = vadd.f32 0.0, %v1175
  %v1177 = vpop.f32.mrb[0].mxu0
  %v1178 = vpop.f32.mrb[0].mxu0
  %v1179 = vpop.f32.mrb[0].mxu0
  %1180 = vdwg.mxu0
  %v1181 = vadd.f32 %v1096, %v1135
  %v1182 = vadd.f32 %v1097, %v1137
  %v1183 = vxor.u32 %v1181, 2147483648
  %v1184 = vxor.u32 %v1182, 2147483648
  %v1185 = vmul.f32 %v1183, 1.442695
  %v1186 = vpow.pop %v1185
  %v1187 = vmul.f32 %v1184, 1.442695
  %v1188 = vpow.pop %v1187
  %v1189 = vadd.f32 %v1186, 1.0
  %v1190 = vadd.f32 %v1188, 1.0
  %v1191 = vrcp.pop %v1189
  %v1192 = vmul.f32 1.0, %v1191
  %v1193 = vrcp.pop %v1190
  %v1194 = vmul.f32 1.0, %v1193
  %v1195 = vadd.f32 %v1176, %v272
  %v1196 = vmul.f32 %v1192, %v1195
  %v1197 = vadd.f32 %v1098, %v1196
  %v1198 = vtanh.pop %v1197
  %v1199 = vsub.f32 1.0, %v1194
  %v1200 = vmul.f32 %v1199, %v1198
  %v1201 = vmul.f32 %v1194, %v1092
  %v1202 = vadd.f32 %v1200, %v1201
  %s1203 = smul.u32 7, 3
  %s1204 = smul.addr %s1203, 8
  %s1205 = scalar_lea.vmem [#allocation2], %s1204
  %v1206 = vld [vmem:[%s1205] sm:$0xff]
  %v1207 = vld [vmem:[%s1205 + $0x8] sm:$0xff]
  %v1208 = vld [vmem:[%s1205 + $0x10] sm:$0xff]
  %v1209 = vpack.c.bf16 %v1202, %v1202
  %1210 = vmatprep.subr.bf16.mxu0 %v393
  %1211 = vmatpush1.bf16.msra.mxu0 %v392
  %1212 = vmatprep.subr.bf16.mxu0 %v396
  %1213 = vmatpush1.bf16.msra.mxu0 %v395
  %1214 = vmatprep.subr.bf16.mxu0 %v399
  %1215 = vmatpush1.bf16.msra.mxu0 %v398
  %1216 = vmatprep.subr.bf16.mxu0 %v402
  %1217 = vmatpush1.bf16.msra.mxu0 %v401
  %1218 = vmatprep.subr.bf16.mxu0 %v405
  %1219 = vmatpush1.bf16.msra.mxu0 %v404
  %1220 = vmatprep.subr.bf16.mxu0 %v408
  %1221 = vmatpush1.bf16.msra.mxu0 %v407
  %1222 = vmatprep.subr.bf16.mxu0 %v411
  %1223 = vmatpush1.bf16.msra.mxu0 %v410
  %1224 = vmatprep.subr.bf16.mxu0 %v414
  %1225 = vmatpush1.bf16.msra.mxu0 %v413
  %1226 = vmatprep.subr.bf16.mxu0 0
  %1227 = vmatpush1.bf16.msra.mxu0 0
  %1228 = vmatprep.subr.bf16.mxu0 0
  %1229 = vmatpush1.bf16.msra.mxu0 0
  %1230 = vmatprep.subr.bf16.mxu0 0
  %1231 = vmatpush1.bf16.msra.mxu0 0
  %1232 = vmatprep.subr.bf16.mxu0 0
  %1233 = vmatpush1.bf16.msra.mxu0 0
  %1234 = vmatprep.subr.bf16.mxu0 0
  %1235 = vmatpush1.bf16.msra.mxu0 0
  %1236 = vmatprep.subr.bf16.mxu0 0
  %1237 = vmatpush1.bf16.msra.mxu0 0
  %1238 = vmatprep.subr.bf16.mxu0 0
  %1239 = vmatpush1.bf16.msra.mxu0 0
  %1240 = vmatprep.subr.bf16.mxu0 0
  %1241 = vmatpush1.bf16.msra.mxu0 0
  %1242 = vmatprep.mubr.bf16.mxu0 0
  %1243 = vmatmul.mubr.bf16.gmra.mrb[0].mxu0 %v1209
  %v1244 = vpop.f32.mrb[0].mxu0
  %v1245 = vadd.f32 0.0, %v1244
  %v1246 = vpop.f32.mrb[0].mxu0
  %v1247 = vadd.f32 0.0, %v1246
  %v1248 = vpop.f32.mrb[0].mxu0
  %v1249 = vpop.f32.mrb[0].mxu0
  %1250 = vdwg.mxu0
  %1251 = vmatprep.subr.bf16.mxu0 0
  %1252 = vmatpush1.bf16.msra.mxu0 %v394
  %1253 = vmatprep.subr.bf16.mxu0 0
  %1254 = vmatpush1.bf16.msra.mxu0 %v397
  %1255 = vmatprep.subr.bf16.mxu0 0
  %1256 = vmatpush1.bf16.msra.mxu0 %v400
  %1257 = vmatprep.subr.bf16.mxu0 0
  %1258 = vmatpush1.bf16.msra.mxu0 %v403
  %1259 = vmatprep.subr.bf16.mxu0 0
  %1260 = vmatpush1.bf16.msra.mxu0 %v406
  %1261 = vmatprep.subr.bf16.mxu0 0
  %1262 = vmatpush1.bf16.msra.mxu0 %v409
  %1263 = vmatprep.subr.bf16.mxu0 0
  %1264 = vmatpush1.bf16.msra.mxu0 %v412
  %1265 = vmatprep.subr.bf16.mxu0 0
  %1266 = vmatpush1.bf16.msra.mxu0 %v415
  %1267 = vmatprep.subr.bf16.mxu0 0
  %1268 = vmatpush1.bf16.msra.mxu0 0
  %1269 = vmatprep.subr.bf16.mxu0 0
  %1270 = vmatpush1.bf16.msra.mxu0 0
  %1271 = vmatprep.subr.bf16.mxu0 0
  %1272 = vmatpush1.bf16.msra.mxu0 0
  %1273 = vmatprep.subr.bf16.mxu0 0
  %1274 = vmatpush1.bf16.msra.mxu0 0
  %1275 = vmatprep.subr.bf16.mxu0 0
  %1276 = vmatpush1.bf16.msra.mxu0 0
  %1277 = vmatprep.subr.bf16.mxu0 0
  %1278 = vmatpush1.bf16.msra.mxu0 0
  %1279 = vmatprep.subr.bf16.mxu0 0
  %1280 = vmatpush1.bf16.msra.mxu0 0
  %1281 = vmatprep.subr.bf16.mxu0 0
  %1282 = vmatpush1.bf16.msra.mxu0 0
  %1283 = vmatprep.mubr.bf16.mxu0 0
  %1284 = vmatmul.mubr.bf16.gmra.mrb[0].mxu0 %v1209
  %v1285 = vpop.f32.mrb[0].mxu0
  %v1286 = vadd.f32 0.0, %v1285
  %v1287 = vpop.f32.mrb[0].mxu0
  %v1288 = vpop.f32.mrb[0].mxu0
  %v1289 = vpop.f32.mrb[0].mxu0
  %1290 = vdwg.mxu0
  %v1291 = vadd.f32 %v1206, %v1245
  %v1292 = vadd.f32 %v1207, %v1247
  %v1293 = vxor.u32 %v1291, 2147483648
  %v1294 = vxor.u32 %v1292, 2147483648
  %v1295 = vmul.f32 %v1293, 1.442695
  %v1296 = vpow.pop %v1295
  %v1297 = vmul.f32 %v1294, 1.442695
  %v1298 = vpow.pop %v1297
  %v1299 = vadd.f32 %v1296, 1.0
  %v1300 = vadd.f32 %v1298, 1.0
  %v1301 = vrcp.pop %v1299
  %v1302 = vmul.f32 1.0, %v1301
  %v1303 = vrcp.pop %v1300
  %v1304 = vmul.f32 1.0, %v1303
  %v1305 = vadd.f32 %v1286, %v272
  %v1306 = vmul.f32 %v1302, %v1305
  %v1307 = vadd.f32 %v1208, %v1306
  %v1308 = vtanh.pop %v1307
  %v1309 = vsub.f32 1.0, %v1304
  %v1310 = vmul.f32 %v1309, %v1308
  %v1311 = vmul.f32 %v1304, %v1202
  %v1312 = vadd.f32 %v1310, %v1311
  %v1313 = vpack.c.bf16 %v1312, %v1312
  %v1314 = vld [vmem:[%s5] sm:$0xf]
  %v1315 = vld [vmem:[%s5 + $0x4] sm:$0xf]
  %v1316 = vld [vmem:[%s5 + $0x8] sm:$0xf]
  %v1317 = vld [vmem:[%s5 + $0xc] sm:$0xf]
  %v1318 = vld [vmem:[%s5 + $0x10] sm:$0xf]
  %v1319 = vld [vmem:[%s5 + $0x14] sm:$0xf]
  %v1320 = vld [vmem:[%s5 + $0x18] sm:$0xf]
  %v1321 = vld [vmem:[%s5 + $0x1c] sm:$0xf]
  %v1322 = vld [vmem:[%s5 + $0x20] sm:$0xf]
  %v1323 = vld [vmem:[%s5 + $0x24] sm:$0xf]
  %v1324 = vld [vmem:[%s5 + $0x28] sm:$0xf]
  %v1325 = vld [vmem:[%s5 + $0x2c] sm:$0xf]
  %v1326 = vld [vmem:[%s5 + $0x30] sm:$0xf]
  %v1327 = vld [vmem:[%s5 + $0x34] sm:$0xf]
  %v1328 = vld [vmem:[%s5 + $0x38] sm:$0xf]
  %v1329 = vld [vmem:[%s5 + $0x3c] sm:$0xf]
  %v1330 = vld [vmem:[%s6] sm:$0x1]
  %v1332 = vlaneseq
  %v1333 = vshrl.u32 %v1332, 7
  %v1334 = vsub.s32 0, %v1333
  %v1335 = vrot.slane %v1330, %v1334
  %v1353 = vunpack.c.l.b16 %v1314
  %v1354 = vunpack.c.l.b16 %v1315
  %v1355 = vunpack.c.l.b16 %v1316
  %v1356 = vunpack.c.l.b16 %v1317
  %v1357 = vunpack.c.l.b16 %v1318
  %v1358 = vunpack.c.l.b16 %v1319
  %v1359 = vunpack.c.l.b16 %v1320
  %v1360 = vunpack.c.l.b16 %v1321
  %v1361 = vunpack.c.l.b16 %v1322
  %v1362 = vunpack.c.l.b16 %v1323
  %v1363 = vunpack.c.l.b16 %v1324
  %v1364 = vunpack.c.l.b16 %v1325
  %v1365 = vunpack.c.l.b16 %v1326
  %v1366 = vunpack.c.l.b16 %v1327
  %v1367 = vunpack.c.l.b16 %v1328
  %v1368 = vunpack.c.l.b16 %v1329
  %v1369 = vpack.c.b16 %v1354, %v1353
  %v1370 = vpack.c.b16 %v1356, %v1355
  %v1371 = vpack.c.b16 %v1358, %v1357
  %v1372 = vpack.c.b16 %v1360, %v1359
  %v1373 = vpack.c.b16 %v1362, %v1361
  %v1374 = vpack.c.b16 %v1364, %v1363
  %v1375 = vpack.c.b16 %v1366, %v1365
  %v1376 = vpack.c.b16 %v1368, %v1367
  %1385 = vmatprep.subr.bf16.mxu0 0
  %1386 = vmatpush1.bf16.msra.mxu0 %v1369
  %1387 = vmatprep.subr.bf16.mxu0 0
  %1388 = vmatpush1.bf16.msra.mxu0 %v1370
  %1389 = vmatprep.subr.bf16.mxu0 0
  %1390 = vmatpush1.bf16.msra.mxu0 %v1371
  %1391 = vmatprep.subr.bf16.mxu0 0
  %1392 = vmatpush1.bf16.msra.mxu0 %v1372
  %1393 = vmatprep.subr.bf16.mxu0 0
  %1394 = vmatpush1.bf16.msra.mxu0 %v1373
  %1395 = vmatprep.subr.bf16.mxu0 0
  %1396 = vmatpush1.bf16.msra.mxu0 %v1374
  %1397 = vmatprep.subr.bf16.mxu0 0
  %1398 = vmatpush1.bf16.msra.mxu0 %v1375
  %1399 = vmatprep.subr.bf16.mxu0 0
  %1400 = vmatpush1.bf16.msra.mxu0 %v1376
  %1401 = vmatprep.subr.bf16.mxu0 0
  %1402 = vmatpush1.bf16.msra.mxu0 0
  %1403 = vmatprep.subr.bf16.mxu0 0
  %1404 = vmatpush1.bf16.msra.mxu0 0
  %1405 = vmatprep.subr.bf16.mxu0 0
  %1406 = vmatpush1.bf16.msra.mxu0 0
  %1407 = vmatprep.subr.bf16.mxu0 0
  %1408 = vmatpush1.bf16.msra.mxu0 0
  %1409 = vmatprep.subr.bf16.mxu0 0
  %1410 = vmatpush1.bf16.msra.mxu0 0
  %1411 = vmatprep.subr.bf16.mxu0 0
  %1412 = vmatpush1.bf16.msra.mxu0 0
  %1413 = vmatprep.subr.bf16.mxu0 0
  %1414 = vmatpush1.bf16.msra.mxu0 0
  %1415 = vmatprep.subr.bf16.mxu0 0
  %1416 = vmatpush1.bf16.msra.mxu0 0
  %1417 = vmatprep.mubr.bf16.mxu0 0
  %1418 = vmatmul.mubr.bf16.gmra.mrb[0].mxu0 %v1313
  %v1419 = vpop.f32.mrb[0].mxu0
  %v1420 = vadd.f32 %v1335, %v1419
  %v1421 = vpop.f32.mrb[0].mxu0
  %v1422 = vpop.f32.mrb[0].mxu0
  %v1423 = vpop.f32.mrb[0].mxu0
  %1424 = vdwg.mxu0
  %1425 = vst [vmem:[%s7] sm:$0xff] %v1420
  // Predicated region
  $region30: #{rnn_forward.1} parent=0 // pred_check
    _
  $region31: #{rnn_forward.1} parent=0 // pred_check_branch
    %1427 = sbr.rel (0) target = $region33
  $region32: #{rnn_forward.1} parent=0 // pred_region
    _
  $region33: #{rnn_forward.1} parent=0 // pred_fallthru
    _
  // Predicated region
  $region34: #{rnn_forward.1} parent=0 // pred_check
    _
  $region35: #{rnn_forward.1} parent=0 // pred_check_branch
    %1429 = sbr.rel (0) target = $region37
  $region36: #{rnn_forward.1} parent=0 // pred_region
    _
  $region37: #{rnn_forward.1} parent=0 // pred_fallthru
    _

</llo_original>
